<compile_context>
chip_gen: v5e
topology: v5e:2x2
jax: 0.10.0
libtpu: 0.0.40
codegen_flags: <defaults>
</compile_context>

<pallas_src>
import math
from functools import partial

import jax
import jax.numpy as jnp
from jax import lax
from jax.experimental import pallas as pl
from jax.experimental.pallas import tpu as pltpu

LN_EPS = 1e-5  # nn.LayerNorm default


def _layernorm(x, gamma, beta):
    # x: (N, D) f32 ; gamma/beta: (1, D) f32
    mean = jnp.mean(x, axis=-1, keepdims=True)
    var = jnp.mean((x - mean) ** 2, axis=-1, keepdims=True)
    return (x - mean) * lax.rsqrt(var + LN_EPS) * gamma + beta


def transformer_kernel(
    x_ref,
    ln1_g_ref, ln1_b_ref,
    wq_ref, wk_ref, wv_ref,
    wout_ref, bout_ref,
    ln2_g_ref, ln2_b_ref,
    w1_ref, b1_ref, w2_ref, b2_ref,
    o_ref,
    x_sc,
    *, heads, dim_head, scale,
):
    l = pl.program_id(1)

    # Load the residual stream once per batch element; carry it in VMEM across layers.
    @pl.when(l == 0)
    def _():
        x_sc[...] = x_ref[0].astype(jnp.float32)

    x = x_sc[...]                                             # (N, D) f32 residual stream
    N, D = x.shape

    # ---------------- Attention block: y1 = Attn(LN(x)) + x ----------------
    xn = _layernorm(x, ln1_g_ref[0], ln1_b_ref[0])            # (N, D) f32
    xn_b = xn.astype(jnp.bfloat16)
    xn_h = jnp.broadcast_to(xn_b[None], (heads, N, D))        # (H, N, D) bf16 (hoisted once)

    # Head-batched projections (bf16 MXU feeds, f32 accumulation).
    q = jnp.einsum('hnd,hdk->hnk', xn_h, wq_ref[0],
                   preferred_element_type=jnp.float32)        # (H, N, dh)
    k = jnp.einsum('hnd,hdk->hnk', xn_h, wk_ref[0],
                   preferred_element_type=jnp.float32)
    v = jnp.einsum('hnd,hdk->hnk', xn_h, wv_ref[0],
                   preferred_element_type=jnp.float32)

    dots = jnp.einsum('hnk,hmk->hnm', q.astype(jnp.bfloat16), k.astype(jnp.bfloat16),
                      preferred_element_type=jnp.float32) * scale       # (H, N, N) f32
    dots = dots - jnp.max(dots, axis=-1, keepdims=True)
    e = jnp.exp(dots)
    attn = e * pl.reciprocal(jnp.sum(e, axis=-1, keepdims=True), approx=True)

    ctx = jnp.einsum('hnm,hmk->hnk', attn.astype(jnp.bfloat16), v.astype(jnp.bfloat16),
                     preferred_element_type=jnp.float32)                # (H, N, dh)

    # Output projection: head-batched matmul then reduce over heads (no concat/relayout).
    proj = jnp.einsum('hnk,hkd->hnd', ctx.astype(jnp.bfloat16), wout_ref[0],
                      preferred_element_type=jnp.float32)               # (H, N, D)
    y1 = jnp.sum(proj, axis=0) + bout_ref[0] + x                        # (N, D) f32

    # ---------------- FeedForward block: y2 = MLP(LN(y1)) + y1 ----------------
    zn = _layernorm(y1, ln2_g_ref[0], ln2_b_ref[0])
    h = jnp.einsum('nd,dh->nh', zn.astype(jnp.bfloat16), w1_ref[0],
                   preferred_element_type=jnp.float32) + b1_ref[0]      # (N, H_mlp) f32
    # exact (erf) GELU in f32, matching PyTorch nn.GELU default
    h = 0.5 * h * (1.0 + lax.erf(h * (1.0 / math.sqrt(2.0))))
    y2 = jnp.einsum('nh,hd->nd', h.astype(jnp.bfloat16), w2_ref[0],
                    preferred_element_type=jnp.float32) + b2_ref[0] + y1

    # Carry updated residual stream; output block is resident across the depth axis,
    # so only the final layer's value is written back to HBM.
    x_sc[...] = y2
    o_ref[0] = y2.astype(o_ref.dtype)


def transformer_forward(x, params, *, heads, dim_head):
    B, N, D = x.shape
    depth = params["ln1_g"].shape[0]
    H_mlp = params["w1"].shape[-1]

    kernel = partial(transformer_kernel, heads=heads, dim_head=dim_head,
                     scale=dim_head ** (-0.5))

    def wspec3(shape):   # (depth, a, b) stacked param, one layer-slice per depth step
        return pl.BlockSpec((1,) + shape[1:], lambda b, l: (l, 0, 0))

    def wspec4(shape):   # (depth, a, b, c)
        return pl.BlockSpec((1,) + shape[1:], lambda b, l: (l, 0, 0, 0))

    x_spec = pl.BlockSpec((1, N, D), lambda b, l: (b, 0, 0))

    return pl.pallas_call(
        kernel,
        out_shape=jax.ShapeDtypeStruct((B, N, D), x.dtype),
        grid=(B, depth),
        in_specs=[
            x_spec,
            wspec3((depth, 1, D)), wspec3((depth, 1, D)),                 # ln1 gamma/beta
            wspec4((depth, heads, D, dim_head)),                          # wq (per-head)
            wspec4((depth, heads, D, dim_head)),                          # wk
            wspec4((depth, heads, D, dim_head)),                          # wv
            wspec4((depth, heads, dim_head, D)),                          # wout (per-head)
            wspec3((depth, 1, D)),                                        # bout
            wspec3((depth, 1, D)), wspec3((depth, 1, D)),                 # ln2 gamma/beta
            wspec3((depth, D, H_mlp)), wspec3((depth, 1, H_mlp)),         # w1, b1
            wspec3((depth, H_mlp, D)), wspec3((depth, 1, D)),             # w2, b2
        ],
        out_specs=pl.BlockSpec((1, N, D), lambda b, l: (b, 0, 0)),
        scratch_shapes=[pltpu.VMEM((N, D), jnp.float32)],                 # residual carry
        compiler_params=pltpu.CompilerParams(
            dimension_semantics=("parallel", "arbitrary"),
            vmem_limit_bytes=32 * 1024 * 1024,
        ),
    )(x, params["ln1_g"], params["ln1_b"], params["wq"], params["wk"], params["wv"],
      params["wout"], params["bout"], params["ln2_g"], params["ln2_b"],
      params["w1"], params["b1"], params["w2"], params["b2"])


def init_params(key, dim, depth, heads, dim_head, mlp_dim):
    """Build depth-stacked params. Matmul weights stored bf16 (MXU feeds);
    LayerNorm params and biases stay f32 (added to f32 accumulators)."""
    inner = heads * dim_head
    k0, k1, k2, k3, k4, k5 = jax.random.split(key, 6)

    ln1_g = jnp.ones((depth, 1, dim), jnp.float32)
    ln1_b = jnp.zeros((depth, 1, dim), jnp.float32)
    ln2_g = jnp.ones((depth, 1, dim), jnp.float32)
    ln2_b = jnp.zeros((depth, 1, dim), jnp.float32)

    wqkv = jax.random.normal(k0, (depth, dim, 3 * inner), jnp.float32) * 0.02  # to_qkv (no bias)
    wout = jax.random.normal(k1, (depth, inner, dim), jnp.float32) * 0.02      # to_out weight
    bout = jax.random.normal(k2, (depth, 1, dim), jnp.float32) * 0.02          # to_out bias
    w1 = jax.random.normal(k3, (depth, dim, mlp_dim), jnp.float32) * 0.02
    b1 = jax.random.normal(k4, (depth, 1, mlp_dim), jnp.float32) * 0.02
    w2 = jax.random.normal(k5, (depth, mlp_dim, dim), jnp.float32) * 0.02
    b2 = jnp.zeros((depth, 1, dim), jnp.float32)

    # torch .chunk(3) order (q, k, v); '(h d)' layout is head-major -> fold head axis
    # into the weights wrapper-side so the kernel never lane-slices per head.
    def split_heads(off):
        wpart = wqkv[:, :, off * inner:(off + 1) * inner]                 # (depth, dim, inner)
        return wpart.reshape(depth, dim, heads, dim_head).transpose(0, 2, 1, 3)  # (depth, H, dim, dh)

    return dict(
        ln1_g=ln1_g, ln1_b=ln1_b,
        wq=split_heads(0).astype(jnp.bfloat16),
        wk=split_heads(1).astype(jnp.bfloat16),
        wv=split_heads(2).astype(jnp.bfloat16),
        wout=wout.reshape(depth, heads, dim_head, dim).astype(jnp.bfloat16),
        bout=bout,
        ln2_g=ln2_g, ln2_b=ln2_b,
        w1=w1.astype(jnp.bfloat16), b1=b1,
        w2=w2.astype(jnp.bfloat16), b2=b2,
    )


if __name__ == "__main__":
    # Transformer(dim=32, depth=2, heads=4, dim_head=8, mlp_dim=64, dropout=0.0)
    B, N, dim = 2, 8, 32
    depth, heads, dim_head, mlp_dim = 2, 4, 8, 64

    key = jax.random.PRNGKey(0)
    key, kx, kp = jax.random.split(key, 3)
    x = jax.random.normal(kx, (B, N, dim), jnp.float32)
    params = init_params(kp, dim, depth, heads, dim_head, mlp_dim)

    out = transformer_forward(x, params, heads=heads, dim_head=dim_head)
    out = jax.block_until_ready(out)
    assert out.shape == (B, N, dim)
    assert bool(jnp.all(jnp.isfinite(out)))
    print("KERNEL_OK")
</pallas_src>

<mosaic_0001>
module attributes {stable_mosaic.version = 11 : i64} {
  func.func @transformer_kernel(%arg0: i32, %arg1: i32, %arg2: memref<1x8x32xf32, #tpu.memory_space<vmem>>, %arg3: memref<1x1x32xf32, #tpu.memory_space<vmem>>, %arg4: memref<1x1x32xf32, #tpu.memory_space<vmem>>, %arg5: memref<1x4x32x8xbf16, #tpu.memory_space<vmem>>, %arg6: memref<1x4x32x8xbf16, #tpu.memory_space<vmem>>, %arg7: memref<1x4x32x8xbf16, #tpu.memory_space<vmem>>, %arg8: memref<1x4x8x32xbf16, #tpu.memory_space<vmem>>, %arg9: memref<1x1x32xf32, #tpu.memory_space<vmem>>, %arg10: memref<1x1x32xf32, #tpu.memory_space<vmem>>, %arg11: memref<1x1x32xf32, #tpu.memory_space<vmem>>, %arg12: memref<1x32x64xbf16, #tpu.memory_space<vmem>>, %arg13: memref<1x1x64xf32, #tpu.memory_space<vmem>>, %arg14: memref<1x64x32xbf16, #tpu.memory_space<vmem>>, %arg15: memref<1x1x32xf32, #tpu.memory_space<vmem>>, %arg16: memref<1x8x32xf32, #tpu.memory_space<vmem>>, %arg17: memref<8x32xf32, #tpu.memory_space<vmem>>) attributes {dimension_semantics = [#tpu.dimension_semantics<parallel>, #tpu.dimension_semantics<arbitrary>], iteration_bounds = array<i64: 2, 2>, scalar_prefetch = 0 : i64, scratch_operands = 1 : i64, tpu.core_type = #tpu.core_type<tc>, window_params = [{transform_indices = @transform_0, window_bounds = array<i64: 1, 8, 32>}, {transform_indices = @transform_1, window_bounds = array<i64: 1, 1, 32>}, {transform_indices = @transform_2, window_bounds = array<i64: 1, 1, 32>}, {transform_indices = @transform_3, window_bounds = array<i64: 1, 4, 32, 8>}, {transform_indices = @transform_4, window_bounds = array<i64: 1, 4, 32, 8>}, {transform_indices = @transform_5, window_bounds = array<i64: 1, 4, 32, 8>}, {transform_indices = @transform_6, window_bounds = array<i64: 1, 4, 8, 32>}, {transform_indices = @transform_7, window_bounds = array<i64: 1, 1, 32>}, {transform_indices = @transform_8, window_bounds = array<i64: 1, 1, 32>}, {transform_indices = @transform_9, window_bounds = array<i64: 1, 1, 32>}, {transform_indices = @transform_10, window_bounds = array<i64: 1, 32, 64>}, {transform_indices = @transform_11, window_bounds = array<i64: 1, 1, 64>}, {transform_indices = @transform_12, window_bounds = array<i64: 1, 64, 32>}, {transform_indices = @transform_13, window_bounds = array<i64: 1, 1, 32>}, {transform_indices = @transform_14, window_bounds = array<i64: 1, 8, 32>}]} {
    %c0_i32 = arith.constant 0 : i32
    %0 = arith.cmpi eq, %arg1, %c0_i32 : i32
    %1 = arith.extui %0 : i1 to i32
    %c0_i32_0 = arith.constant 0 : i32
    %2 = arith.cmpi ne, %1, %c0_i32_0 : i32
    scf.if %2 {
      %c0_74 = arith.constant 0 : index
      %c0_75 = arith.constant 0 : index
      %c0_76 = arith.constant 0 : index
      %126 = vector.load %arg2[%c0_74, %c0_75, %c0_76] : memref<1x8x32xf32, #tpu.memory_space<vmem>>, vector<1x8x32xf32>
      %127 = vector.shape_cast %126 : vector<1x8x32xf32> to vector<8x32xf32>
      %c0_77 = arith.constant 0 : index
      %c0_78 = arith.constant 0 : index
      %128 = vector.load %arg17[%c0_77, %c0_78] : memref<8x32xf32, #tpu.memory_space<vmem>>, vector<8x32xf32>
      tpu.vector_store %arg17[%c0_77, %c0_78], %127 {strides = array<i32>} : memref<8x32xf32, #tpu.memory_space<vmem>>, vector<8x32xf32>,
    } else {
    }
    %c0 = arith.constant 0 : index
    %c0_1 = arith.constant 0 : index
    %3 = vector.load %arg17[%c0, %c0_1] : memref<8x32xf32, #tpu.memory_space<vmem>>, vector<8x32xf32>
    %c0_2 = arith.constant 0 : index
    %c0_3 = arith.constant 0 : index
    %c0_4 = arith.constant 0 : index
    %4 = vector.load %arg3[%c0_2, %c0_3, %c0_4] : memref<1x1x32xf32, #tpu.memory_space<vmem>>, vector<1x1x32xf32>
    %5 = vector.shape_cast %4 : vector<1x1x32xf32> to vector<1x32xf32>
    %c0_5 = arith.constant 0 : index
    %c0_6 = arith.constant 0 : index
    %c0_7 = arith.constant 0 : index
    %6 = vector.load %arg4[%c0_5, %c0_6, %c0_7] : memref<1x1x32xf32, #tpu.memory_space<vmem>>, vector<1x1x32xf32>
    %7 = vector.shape_cast %6 : vector<1x1x32xf32> to vector<1x32xf32>
    %cst = arith.constant dense<0.000000e+00> : vector<8xf32>
    %8 = vector.multi_reduction <add>, %3, %cst [1] : vector<8x32xf32> to vector<8xf32>
    %9 = vector.shape_cast %8 : vector<8xf32> to vector<8x1xf32>
    %cst_8 = arith.constant 3.200000e+01 : f32
    %10 = vector.broadcast %cst_8 : f32 to vector<8x1xf32>
    %11 = arith.divf %9, %10 : vector<8x1xf32>
    %12 = vector.broadcast %11 : vector<8x1xf32> to vector<8x32xf32>
    %13 = arith.subf %3, %12 : vector<8x32xf32>
    %14 = arith.mulf %13, %13 : vector<8x32xf32>
    %cst_9 = arith.constant dense<0.000000e+00> : vector<8xf32>
    %15 = vector.multi_reduction <add>, %14, %cst_9 [1] : vector<8x32xf32> to vector<8xf32>
    %16 = vector.shape_cast %15 : vector<8xf32> to vector<8x1xf32>
    %cst_10 = arith.constant 3.200000e+01 : f32
    %17 = vector.broadcast %cst_10 : f32 to vector<8x1xf32>
    %18 = arith.divf %16, %17 : vector<8x1xf32>
    %19 = vector.broadcast %11 : vector<8x1xf32> to vector<8x32xf32>
    %20 = arith.subf %3, %19 : vector<8x32xf32>
    %cst_11 = arith.constant 9.99999974E-6 : f32
    %21 = vector.broadcast %cst_11 : f32 to vector<8x1xf32>
    %22 = arith.addf %18, %21 : vector<8x1xf32>
    %23 = math.rsqrt %22 : vector<8x1xf32>
    %24 = vector.broadcast %23 : vector<8x1xf32> to vector<8x32xf32>
    %25 = arith.mulf %20, %24 : vector<8x32xf32>
    %26 = vector.broadcast %5 : vector<1x32xf32> to vector<8x32xf32>
    %27 = arith.mulf %25, %26 : vector<8x32xf32>
    %28 = vector.broadcast %7 : vector<1x32xf32> to vector<8x32xf32>
    %29 = arith.addf %27, %28 : vector<8x32xf32>
    %30 = arith.truncf %29 : vector<8x32xf32> to vector<8x32xbf16>
    %31 = vector.shape_cast %30 : vector<8x32xbf16> to vector<1x8x32xbf16>
    %32 = vector.shape_cast %31 : vector<1x8x32xbf16> to vector<1x8x32xbf16>
    %33 = vector.broadcast %32 : vector<1x8x32xbf16> to vector<4x8x32xbf16>
    %c0_12 = arith.constant 0 : index
    %c0_13 = arith.constant 0 : index
    %c0_14 = arith.constant 0 : index
    %c0_15 = arith.constant 0 : index
    %34 = vector.load %arg5[%c0_12, %c0_13, %c0_14, %c0_15] : memref<1x4x32x8xbf16, #tpu.memory_space<vmem>>, vector<1x4x32x8xbf16>
    %35 = vector.shape_cast %34 : vector<1x4x32x8xbf16> to vector<4x32x8xbf16>
    "tpu.trace_start"() <{level = 10 : i32, message = "hnd,hdk->hnk"}> : () -> ()
    %cst_16 = arith.constant dense<0.000000e+00> : vector<4x8x8xf32>
    %36 = tpu.matmul %33, %35, %cst_16 {dimension_numbers = #tpu.dot_dimension_numbers<[2], [1], [1], [2], [0, 0, 0, 1, 1, 2], [0], [0]>} : vector<4x8x32xbf16>, vector<4x32x8xbf16>, vector<4x8x8xf32> -> vector<4x8x8xf32>
    "tpu.trace_stop"() : () -> ()
    %c0_17 = arith.constant 0 : index
    %c0_18 = arith.constant 0 : index
    %c0_19 = arith.constant 0 : index
    %c0_20 = arith.constant 0 : index
    %37 = vector.load %arg6[%c0_17, %c0_18, %c0_19, %c0_20] : memref<1x4x32x8xbf16, #tpu.memory_space<vmem>>, vector<1x4x32x8xbf16>
    %38 = vector.shape_cast %37 : vector<1x4x32x8xbf16> to vector<4x32x8xbf16>
    "tpu.trace_start"() <{level = 10 : i32, message = "hnd,hdk->hnk"}> : () -> ()
    %cst_21 = arith.constant dense<0.000000e+00> : vector<4x8x8xf32>
    %39 = tpu.matmul %33, %38, %cst_21 {dimension_numbers = #tpu.dot_dimension_numbers<[2], [1], [1], [2], [0, 0, 0, 1, 1, 2], [0], [0]>} : vector<4x8x32xbf16>, vector<4x32x8xbf16>, vector<4x8x8xf32> -> vector<4x8x8xf32>
    "tpu.trace_stop"() : () -> ()
    %c0_22 = arith.constant 0 : index
    %c0_23 = arith.constant 0 : index
    %c0_24 = arith.constant 0 : index
    %c0_25 = arith.constant 0 : index
    %40 = vector.load %arg7[%c0_22, %c0_23, %c0_24, %c0_25] : memref<1x4x32x8xbf16, #tpu.memory_space<vmem>>, vector<1x4x32x8xbf16>
    %41 = vector.shape_cast %40 : vector<1x4x32x8xbf16> to vector<4x32x8xbf16>
    "tpu.trace_start"() <{level = 10 : i32, message = "hnd,hdk->hnk"}> : () -> ()
    %cst_26 = arith.constant dense<0.000000e+00> : vector<4x8x8xf32>
    %42 = tpu.matmul %33, %41, %cst_26 {dimension_numbers = #tpu.dot_dimension_numbers<[2], [1], [1], [2], [0, 0, 0, 1, 1, 2], [0], [0]>} : vector<4x8x32xbf16>, vector<4x32x8xbf16>, vector<4x8x8xf32> -> vector<4x8x8xf32>
    "tpu.trace_stop"() : () -> ()
    %43 = arith.truncf %36 : vector<4x8x8xf32> to vector<4x8x8xbf16>
    %44 = arith.truncf %39 : vector<4x8x8xf32> to vector<4x8x8xbf16>
    "tpu.trace_start"() <{level = 10 : i32, message = "hnk,hmk->hnm"}> : () -> ()
    %cst_27 = arith.constant dense<0.000000e+00> : vector<4x8x8xf32>
    %45 = tpu.matmul %43, %44, %cst_27 {dimension_numbers = #tpu.dot_dimension_numbers<[2], [2], [1], [1], [0, 0, 0, 1, 1, 1], [0], [0]>} : vector<4x8x8xbf16>, vector<4x8x8xbf16>, vector<4x8x8xf32> -> vector<4x8x8xf32>
    "tpu.trace_stop"() : () -> ()
    %cst_28 = arith.constant 0.353553385 : f32
    %46 = vector.broadcast %cst_28 : f32 to vector<4x8x8xf32>
    %47 = arith.mulf %45, %46 : vector<4x8x8xf32>
    %cst_29 = arith.constant dense<0xFF800000> : vector<4x8xf32>
    %48 = vector.multi_reduction <maximumf>, %47, %cst_29 [2] : vector<4x8x8xf32> to vector<4x8xf32>
    %49 = vector.shape_cast %48 : vector<4x8xf32> to vector<4x8x1xf32>
    %50 = vector.broadcast %49 : vector<4x8x1xf32> to vector<4x8x8xf32>
    %51 = arith.subf %47, %50 : vector<4x8x8xf32>
    %52 = math.exp %51 : vector<4x8x8xf32>
    %cst_30 = arith.constant dense<0.000000e+00> : vector<4x8xf32>
    %53 = vector.multi_reduction <add>, %52, %cst_30 [2] : vector<4x8x8xf32> to vector<4x8xf32>
    %54 = vector.shape_cast %53 : vector<4x8xf32> to vector<4x8x1xf32>
    %55 = tpu.reciprocal %54 {approx = true} : vector<4x8x1xf32> -> vector<4x8x1xf32>
    %56 = vector.broadcast %55 : vector<4x8x1xf32> to vector<4x8x8xf32>
    %57 = arith.mulf %52, %56 : vector<4x8x8xf32>
    %58 = arith.truncf %57 : vector<4x8x8xf32> to vector<4x8x8xbf16>
    %59 = arith.truncf %42 : vector<4x8x8xf32> to vector<4x8x8xbf16>
    "tpu.trace_start"() <{level = 10 : i32, message = "hnm,hmk->hnk"}> : () -> ()
    %cst_31 = arith.constant dense<0.000000e+00> : vector<4x8x8xf32>
    %60 = tpu.matmul %58, %59, %cst_31 {dimension_numbers = #tpu.dot_dimension_numbers<[2], [1], [1], [2], [0, 0, 0, 1, 1, 2], [0], [0]>} : vector<4x8x8xbf16>, vector<4x8x8xbf16>, vector<4x8x8xf32> -> vector<4x8x8xf32>
    "tpu.trace_stop"() : () -> ()
    %61 = arith.truncf %60 : vector<4x8x8xf32> to vector<4x8x8xbf16>
    %c0_32 = arith.constant 0 : index
    %c0_33 = arith.constant 0 : index
    %c0_34 = arith.constant 0 : index
    %c0_35 = arith.constant 0 : index
    %62 = vector.load %arg8[%c0_32, %c0_33, %c0_34, %c0_35] : memref<1x4x8x32xbf16, #tpu.memory_space<vmem>>, vector<1x4x8x32xbf16>
    %63 = vector.shape_cast %62 : vector<1x4x8x32xbf16> to vector<4x8x32xbf16>
    "tpu.trace_start"() <{level = 10 : i32, message = "hnk,hkd->hnd"}> : () -> ()
    %cst_36 = arith.constant dense<0.000000e+00> : vector<4x8x32xf32>
    %64 = tpu.matmul %61, %63, %cst_36 {dimension_numbers = #tpu.dot_dimension_numbers<[2], [1], [1], [2], [0, 0, 0, 1, 1, 2], [0], [0]>} : vector<4x8x8xbf16>, vector<4x8x32xbf16>, vector<4x8x32xf32> -> vector<4x8x32xf32>
    "tpu.trace_stop"() : () -> ()
    %cst_37 = arith.constant dense<0.000000e+00> : vector<8x32xf32>
    %65 = vector.multi_reduction <add>, %64, %cst_37 [0] : vector<4x8x32xf32> to vector<8x32xf32>
    %c0_38 = arith.constant 0 : index
    %c0_39 = arith.constant 0 : index
    %c0_40 = arith.constant 0 : index
    %66 = vector.load %arg9[%c0_38, %c0_39, %c0_40] : memref<1x1x32xf32, #tpu.memory_space<vmem>>, vector<1x1x32xf32>
    %67 = vector.shape_cast %66 : vector<1x1x32xf32> to vector<1x32xf32>
    %68 = vector.broadcast %67 : vector<1x32xf32> to vector<8x32xf32>
    %69 = arith.addf %65, %68 : vector<8x32xf32>
    %70 = arith.addf %69, %3 : vector<8x32xf32>
    %c0_41 = arith.constant 0 : index
    %c0_42 = arith.constant 0 : index
    %c0_43 = arith.constant 0 : index
    %71 = vector.load %arg10[%c0_41, %c0_42, %c0_43] : memref<1x1x32xf32, #tpu.memory_space<vmem>>, vector<1x1x32xf32>
    %72 = vector.shape_cast %71 : vector<1x1x32xf32> to vector<1x32xf32>
    %c0_44 = arith.constant 0 : index
    %c0_45 = arith.constant 0 : index
    %c0_46 = arith.constant 0 : index
    %73 = vector.load %arg11[%c0_44, %c0_45, %c0_46] : memref<1x1x32xf32, #tpu.memory_space<vmem>>, vector<1x1x32xf32>
    %74 = vector.shape_cast %73 : vector<1x1x32xf32> to vector<1x32xf32>
    %cst_47 = arith.constant dense<0.000000e+00> : vector<8xf32>
    %75 = vector.multi_reduction <add>, %70, %cst_47 [1] : vector<8x32xf32> to vector<8xf32>
    %76 = vector.shape_cast %75 : vector<8xf32> to vector<8x1xf32>
    %cst_48 = arith.constant 3.200000e+01 : f32
    %77 = vector.broadcast %cst_48 : f32 to vector<8x1xf32>
    %78 = arith.divf %76, %77 : vector<8x1xf32>
    %79 = vector.broadcast %78 : vector<8x1xf32> to vector<8x32xf32>
    %80 = arith.subf %70, %79 : vector<8x32xf32>
    %81 = arith.mulf %80, %80 : vector<8x32xf32>
    %cst_49 = arith.constant dense<0.000000e+00> : vector<8xf32>
    %82 = vector.multi_reduction <add>, %81, %cst_49 [1] : vector<8x32xf32> to vector<8xf32>
    %83 = vector.shape_cast %82 : vector<8xf32> to vector<8x1xf32>
    %cst_50 = arith.constant 3.200000e+01 : f32
    %84 = vector.broadcast %cst_50 : f32 to vector<8x1xf32>
    %85 = arith.divf %83, %84 : vector<8x1xf32>
    %86 = vector.broadcast %78 : vector<8x1xf32> to vector<8x32xf32>
    %87 = arith.subf %70, %86 : vector<8x32xf32>
    %cst_51 = arith.constant 9.99999974E-6 : f32
    %88 = vector.broadcast %cst_51 : f32 to vector<8x1xf32>
    %89 = arith.addf %85, %88 : vector<8x1xf32>
    %90 = math.rsqrt %89 : vector<8x1xf32>
    %91 = vector.broadcast %90 : vector<8x1xf32> to vector<8x32xf32>
    %92 = arith.mulf %87, %91 : vector<8x32xf32>
    %93 = vector.broadcast %72 : vector<1x32xf32> to vector<8x32xf32>
    %94 = arith.mulf %92, %93 : vector<8x32xf32>
    %95 = vector.broadcast %74 : vector<1x32xf32> to vector<8x32xf32>
    %96 = arith.addf %94, %95 : vector<8x32xf32>
    %97 = arith.truncf %96 : vector<8x32xf32> to vector<8x32xbf16>
    %c0_52 = arith.constant 0 : index
    %c0_53 = arith.constant 0 : index
    %c0_54 = arith.constant 0 : index
    %98 = vector.load %arg12[%c0_52, %c0_53, %c0_54] : memref<1x32x64xbf16, #tpu.memory_space<vmem>>, vector<1x32x64xbf16>
    %99 = vector.shape_cast %98 : vector<1x32x64xbf16> to vector<32x64xbf16>
    "tpu.trace_start"() <{level = 10 : i32, message = "nd,dh->nh"}> : () -> ()
    %cst_55 = arith.constant dense<0.000000e+00> : vector<8x64xf32>
    %100 = tpu.matmul %97, %99, %cst_55 {dimension_numbers = #tpu.dot_dimension_numbers<[1], [0], [0], [1], [0, 0, 1, 1], [], []>} : vector<8x32xbf16>, vector<32x64xbf16>, vector<8x64xf32> -> vector<8x64xf32>
    "tpu.trace_stop"() : () -> ()
    %c0_56 = arith.constant 0 : index
    %c0_57 = arith.constant 0 : index
    %c0_58 = arith.constant 0 : index
    %101 = vector.load %arg13[%c0_56, %c0_57, %c0_58] : memref<1x1x64xf32, #tpu.memory_space<vmem>>, vector<1x1x64xf32>
    %102 = vector.shape_cast %101 : vector<1x1x64xf32> to vector<1x64xf32>
    %103 = vector.broadcast %102 : vector<1x64xf32> to vector<8x64xf32>
    %104 = arith.addf %100, %103 : vector<8x64xf32>
    %cst_59 = arith.constant 5.000000e-01 : f32
    %105 = vector.broadcast %cst_59 : f32 to vector<8x64xf32>
    %106 = arith.mulf %105, %104 : vector<8x64xf32>
    %cst_60 = arith.constant 0.707106769 : f32
    %107 = vector.broadcast %cst_60 : f32 to vector<8x64xf32>
    %108 = arith.mulf %104, %107 : vector<8x64xf32>
    %109 = math.erf %108 : vector<8x64xf32>
    %cst_61 = arith.constant 1.000000e+00 : f32
    %110 = vector.broadcast %cst_61 : f32 to vector<8x64xf32>
    %111 = arith.addf %110, %109 : vector<8x64xf32>
    %112 = arith.mulf %106, %111 : vector<8x64xf32>
    %113 = arith.truncf %112 : vector<8x64xf32> to vector<8x64xbf16>
    %c0_62 = arith.constant 0 : index
    %c0_63 = arith.constant 0 : index
    %c0_64 = arith.constant 0 : index
    %114 = vector.load %arg14[%c0_62, %c0_63, %c0_64] : memref<1x64x32xbf16, #tpu.memory_space<vmem>>, vector<1x64x32xbf16>
    %115 = vector.shape_cast %114 : vector<1x64x32xbf16> to vector<64x32xbf16>
    "tpu.trace_start"() <{level = 10 : i32, message = "nh,hd->nd"}> : () -> ()
    %cst_65 = arith.constant dense<0.000000e+00> : vector<8x32xf32>
    %116 = tpu.matmul %113, %115, %cst_65 {dimension_numbers = #tpu.dot_dimension_numbers<[1], [0], [0], [1], [0, 0, 1, 1], [], []>} : vector<8x64xbf16>, vector<64x32xbf16>, vector<8x32xf32> -> vector<8x32xf32>
    "tpu.trace_stop"() : () -> ()
    %c0_66 = arith.constant 0 : index
    %c0_67 = arith.constant 0 : index
    %c0_68 = arith.constant 0 : index
    %117 = vector.load %arg15[%c0_66, %c0_67, %c0_68] : memref<1x1x32xf32, #tpu.memory_space<vmem>>, vector<1x1x32xf32>
    %118 = vector.shape_cast %117 : vector<1x1x32xf32> to vector<1x32xf32>
    %119 = vector.broadcast %118 : vector<1x32xf32> to vector<8x32xf32>
    %120 = arith.addf %116, %119 : vector<8x32xf32>
    %121 = arith.addf %120, %70 : vector<8x32xf32>
    %c0_69 = arith.constant 0 : index
    %c0_70 = arith.constant 0 : index
    %122 = vector.load %arg17[%c0_69, %c0_70] : memref<8x32xf32, #tpu.memory_space<vmem>>, vector<8x32xf32>
    tpu.vector_store %arg17[%c0_69, %c0_70], %121 {strides = array<i32>} : memref<8x32xf32, #tpu.memory_space<vmem>>, vector<8x32xf32>,
    %c0_71 = arith.constant 0 : index
    %c0_72 = arith.constant 0 : index
    %c0_73 = arith.constant 0 : index
    %123 = vector.load %arg16[%c0_71, %c0_72, %c0_73] : memref<1x8x32xf32, #tpu.memory_space<vmem>>, vector<1x8x32xf32>
    %124 = vector.shape_cast %123 : vector<1x8x32xf32> to vector<8x32xf32>
    %125 = vector.shape_cast %121 : vector<8x32xf32> to vector<1x8x32xf32>
    tpu.vector_store %arg16[%c0_71, %c0_72, %c0_73], %125 {strides = array<i32>} : memref<1x8x32xf32, #tpu.memory_space<vmem>>, vector<1x8x32xf32>,
    return
  }
  func.func @transform_0(%arg0: i32, %arg1: i32) -> (i32, i32, i32) {
    %c0_i32 = arith.constant 0 : i32
    %c0_i32_0 = arith.constant 0 : i32
    %c0_i32_1 = arith.constant 0 : i32
    return %arg0, %c0_i32, %c0_i32_0 : i32, i32, i32
  }
  func.func @transform_1(%arg0: i32, %arg1: i32) -> (i32, i32, i32) {
    %c0_i32 = arith.constant 0 : i32
    %c0_i32_0 = arith.constant 0 : i32
    %c0_i32_1 = arith.constant 0 : i32
    return %arg1, %c0_i32, %c0_i32_0 : i32, i32, i32
  }
  func.func @transform_2(%arg0: i32, %arg1: i32) -> (i32, i32, i32) {
    %c0_i32 = arith.constant 0 : i32
    %c0_i32_0 = arith.constant 0 : i32
    %c0_i32_1 = arith.constant 0 : i32
    return %arg1, %c0_i32, %c0_i32_0 : i32, i32, i32
  }
  func.func @transform_3(%arg0: i32, %arg1: i32) -> (i32, i32, i32, i32) {
    %c0_i32 = arith.constant 0 : i32
    %c0_i32_0 = arith.constant 0 : i32
    %c0_i32_1 = arith.constant 0 : i32
    %c0_i32_2 = arith.constant 0 : i32
    return %arg1, %c0_i32, %c0_i32_0, %c0_i32_1 : i32, i32, i32, i32
  }
  func.func @transform_4(%arg0: i32, %arg1: i32) -> (i32, i32, i32, i32) {
    %c0_i32 = arith.constant 0 : i32
    %c0_i32_0 = arith.constant 0 : i32
    %c0_i32_1 = arith.constant 0 : i32
    %c0_i32_2 = arith.constant 0 : i32
    return %arg1, %c0_i32, %c0_i32_0, %c0_i32_1 : i32, i32, i32, i32
  }
  func.func @transform_5(%arg0: i32, %arg1: i32) -> (i32, i32, i32, i32) {
    %c0_i32 = arith.constant 0 : i32
    %c0_i32_0 = arith.constant 0 : i32
    %c0_i32_1 = arith.constant 0 : i32
    %c0_i32_2 = arith.constant 0 : i32
    return %arg1, %c0_i32, %c0_i32_0, %c0_i32_1 : i32, i32, i32, i32
  }
  func.func @transform_6(%arg0: i32, %arg1: i32) -> (i32, i32, i32, i32) {
    %c0_i32 = arith.constant 0 : i32
    %c0_i32_0 = arith.constant 0 : i32
    %c0_i32_1 = arith.constant 0 : i32
    %c0_i32_2 = arith.constant 0 : i32
    return %arg1, %c0_i32, %c0_i32_0, %c0_i32_1 : i32, i32, i32, i32
  }
  func.func @transform_7(%arg0: i32, %arg1: i32) -> (i32, i32, i32) {
    %c0_i32 = arith.constant 0 : i32
    %c0_i32_0 = arith.constant 0 : i32
    %c0_i32_1 = arith.constant 0 : i32
    return %arg1, %c0_i32, %c0_i32_0 : i32, i32, i32
  }
  func.func @transform_8(%arg0: i32, %arg1: i32) -> (i32, i32, i32) {
    %c0_i32 = arith.constant 0 : i32
    %c0_i32_0 = arith.constant 0 : i32
    %c0_i32_1 = arith.constant 0 : i32
    return %arg1, %c0_i32, %c0_i32_0 : i32, i32, i32
  }
  func.func @transform_9(%arg0: i32, %arg1: i32) -> (i32, i32, i32) {
    %c0_i32 = arith.constant 0 : i32
    %c0_i32_0 = arith.constant 0 : i32
    %c0_i32_1 = arith.constant 0 : i32
    return %arg1, %c0_i32, %c0_i32_0 : i32, i32, i32
  }
  func.func @transform_10(%arg0: i32, %arg1: i32) -> (i32, i32, i32) {
    %c0_i32 = arith.constant 0 : i32
    %c0_i32_0 = arith.constant 0 : i32
    %c0_i32_1 = arith.constant 0 : i32
    return %arg1, %c0_i32, %c0_i32_0 : i32, i32, i32
  }
  func.func @transform_11(%arg0: i32, %arg1: i32) -> (i32, i32, i32) {
    %c0_i32 = arith.constant 0 : i32
    %c0_i32_0 = arith.constant 0 : i32
    %c0_i32_1 = arith.constant 0 : i32
    return %arg1, %c0_i32, %c0_i32_0 : i32, i32, i32
  }
  func.func @transform_12(%arg0: i32, %arg1: i32) -> (i32, i32, i32) {
    %c0_i32 = arith.constant 0 : i32
    %c0_i32_0 = arith.constant 0 : i32
    %c0_i32_1 = arith.constant 0 : i32
    return %arg1, %c0_i32, %c0_i32_0 : i32, i32, i32
  }
  func.func @transform_13(%arg0: i32, %arg1: i32) -> (i32, i32, i32) {
    %c0_i32 = arith.constant 0 : i32
    %c0_i32_0 = arith.constant 0 : i32
    %c0_i32_1 = arith.constant 0 : i32
    return %arg1, %c0_i32, %c0_i32_0 : i32, i32, i32
  }
  func.func @transform_14(%arg0: i32, %arg1: i32) -> (i32, i32, i32) {
    %c0_i32 = arith.constant 0 : i32
    %c0_i32_0 = arith.constant 0 : i32
    %c0_i32_1 = arith.constant 0 : i32
    return %arg0, %c0_i32, %c0_i32_0 : i32, i32, i32
  }
}

</mosaic_0001>

<llo_original>
// kernel: tpu_custom_call.1
$region0: #{tpu_custom_call.1}
  #allocation0 [shape = 'u32[]', space=smem, size = 0x4, offset = 0x4, fixed_abs, tag = 'smem constant byte address 0x4 - core index']
  #allocation1 [shape = 'u32[72,128]{1,0:T(1,128)}', space=vmem, size = 0x9000, scoped, tag = 'internal scratch']
  #allocation2 [shape = 'f32[8,32]{1,0:T(8,128)}', space=vmem, size = 0x1000, scoped, tag = 'scratch operand']
  %s0 = inlined_call_operand.vmem [shape: f32[2,8,32], index: 0, kind: input, shape index: {}]
  %s1 = inlined_call_operand.vmem [shape: f32[2,1,32], index: 1, kind: input, shape index: {}]
  %s2 = inlined_call_operand.vmem [shape: f32[2,1,32], index: 2, kind: input, shape index: {}]
  %s3 = inlined_call_operand.vmem [shape: bf16[2,4,32,8], index: 3, kind: input, shape index: {}]
  %s4 = inlined_call_operand.vmem [shape: bf16[2,4,32,8], index: 4, kind: input, shape index: {}]
  %s5 = inlined_call_operand.vmem [shape: bf16[2,4,32,8], index: 5, kind: input, shape index: {}]
  %s6 = inlined_call_operand.vmem [shape: bf16[2,4,8,32], index: 6, kind: input, shape index: {}]
  %s7 = inlined_call_operand.vmem [shape: f32[2,1,32], index: 7, kind: input, shape index: {}]
  %s8 = inlined_call_operand.vmem [shape: f32[2,1,32], index: 8, kind: input, shape index: {}]
  %s9 = inlined_call_operand.vmem [shape: f32[2,1,32], index: 9, kind: input, shape index: {}]
  %s10 = inlined_call_operand.vmem [shape: bf16[2,32,64], index: 10, kind: input, shape index: {}]
  %s11 = inlined_call_operand.vmem [shape: f32[2,1,64], index: 11, kind: input, shape index: {}]
  %s12 = inlined_call_operand.vmem [shape: bf16[2,64,32], index: 12, kind: input, shape index: {}]
  %s13 = inlined_call_operand.vmem [shape: f32[2,1,32], index: 13, kind: input, shape index: {}]
  %s14 = inlined_call_operand.hbm [shape: f32[2,8,32], index: 14, kind: output, shape index: {}]
  %s15 = sld [smem:[#allocation0]]
  $region93: #{tpu_custom_call.1} parent=0
    _
  %s17 = ssub.s32 1, %s15
  %s18 = scalar_select 0, %s17, %s15
  $region1: #{tpu_custom_call.1} parent=0
    #allocation3 [shape = 'u8[8192]{0}', space=vmem, size = 0x2000, scoped, tag = 'output window, operand 0']
    #allocation4 [shape = 's32[2]{0}', space=sflag, size = 0x8, scoped, tag = 'scoped memory for tpu_custom_call.1']
    %19 = vsyncpa [#allocation4], 0
    %s20 = scalar_lea.sflag [#allocation4], 1
    %21 = vsyncpa %s20, 0
    loop: start=0, step=1, limit=6
    $region2: #{tpu_custom_call.1} parent=1 // loop_pre_header
      _
    $region3: #{tpu_custom_call.1} parent=1 // loop_header
      %s23 = sphi 0, %s27
      %p24 = scmp.ge.s32.totalorder %s23, 6
      %s30 = sphi 0, %s42
      %s31 = sphi 0, %s38
      %s32 = sphi 0, %s30
      %s33 = sphi 0, %s31
      %s34 = sphi 0, %s32
      %s35 = sphi 0, %s33
      %s45 = sphi 0, %s47
      %s48 = sphi 0, %s45
      %s49 = sphi 0, %s48
      %s65 = sphi 0, %s49
      %s71 = sphi 0, %s73
      %s74 = sphi 0, %s71
      %s75 = sphi 0, %s74
      %s91 = sphi 0, %s75
      %s97 = sphi 0, %s99
      %s100 = sphi 0, %s97
      %s101 = sphi 0, %s100
      %s117 = sphi 0, %s101
      %s123 = sphi 0, %s125
      %s126 = sphi 0, %s123
      %s127 = sphi 0, %s126
      %s143 = sphi 0, %s127
      %s149 = sphi 0, %s151
      %s152 = sphi 0, %s149
      %s153 = sphi 0, %s152
      %s169 = sphi 0, %s153
      %s175 = sphi 0, %s177
      %s178 = sphi 0, %s175
      %s179 = sphi 0, %s178
      %s195 = sphi 0, %s179
      %s201 = sphi 0, %s203
      %s204 = sphi 0, %s201
      %s205 = sphi 0, %s204
      %s221 = sphi 0, %s205
      %s227 = sphi 0, %s229
      %s230 = sphi 0, %s227
      %s231 = sphi 0, %s230
      %s247 = sphi 0, %s231
      %s253 = sphi 0, %s255
      %s256 = sphi 0, %s253
      %s257 = sphi 0, %s256
      %s273 = sphi 0, %s257
      %s279 = sphi 0, %s281
      %s282 = sphi 0, %s279
      %s283 = sphi 0, %s282
      %s299 = sphi 0, %s283
      %s305 = sphi 0, %s307
      %s308 = sphi 0, %s305
      %s309 = sphi 0, %s308
      %s325 = sphi 0, %s309
      %s331 = sphi 0, %s333
      %s334 = sphi 0, %s331
      %s335 = sphi 0, %s334
      %s351 = sphi 0, %s335
      %s357 = sphi 0, %s359
      %s360 = sphi 0, %s357
      %s361 = sphi 0, %s360
      %s377 = sphi 0, %s361
      %s383 = sphi 0, %s385
      %s386 = sphi 0, %s383
      %s387 = sphi 0, %s386
      %s403 = sphi 0, %s387
      %s409 = sphi 0, %s411
      %s412 = sphi 0, %s409
      %s413 = sphi 0, %s412
      %s429 = sphi 0, %s413
    $region4: #{tpu_custom_call.1} parent=1 // loop_header_branch
      %26 = sbr.rel (%p24) target = $region8
    $region5: #{tpu_custom_call.1} parent=1 // loop_body
      %s28 = ssub.s32 %s23, 1
      %s29 = ssub.s32 %s23, 2
      %s36 = sadd.s32 1, %s31
      %p37 = scmp.ge.s32.totalorder %s36, 2
      %s38 = scalar_select %p37, 0, %s36
      %s39 = sadd.s32 1, %s30
      %s40 = scalar_select %p37, %s39, %s30
      %p41 = scmp.ge.s32.totalorder %s40, 2
      %s42 = scalar_select %p41, 0, %s40
      %s43 = ssub.s32 %s30, %s42
      %p44 = scmp.eq.s32.totalorder %s43, 0
      %s46 = sadd.s32 %s45, 1
      %s47 = scalar_select %p44, %s45, %s46
      %p50 = pneg %p44
      %p51 = scmp.eq.s32.totalorder %s23, 3
      %p52 = por %p50, %p51
      %p53 = scmp.ne.s32.totalorder %s45, %s48
      %p54 = scmp.eq.s32.totalorder %s23, 0
      %p55 = por %p53, %p54
      %p56 = scmp.ne.s32.totalorder %s45, %s48
      %p57 = scmp.eq.s32.totalorder %s28, 3
      %p58 = por %p56, %p57
      %p59 = scmp.ne.s32.totalorder %s48, %s49
      %p60 = scmp.eq.s32.totalorder %s28, 0
      %p61 = por %p59, %p60
      %p62 = scmp.ne.s32.totalorder %s48, %s49
      %p63 = scmp.eq.s32.totalorder %s29, 3
      %p64 = por %p62, %p63
      %p66 = scmp.ne.s32.totalorder %s49, %s65
      %p67 = scmp.eq.s32.totalorder %s29, 0
      %p68 = por %p66, %p67
      %s69 = ssub.s32 %s31, %s38
      %p70 = scmp.eq.s32.totalorder %s69, 0
      %s72 = sadd.s32 %s71, 1
      %s73 = scalar_select %p70, %s71, %s72
      %p76 = pneg %p70
      %p77 = scmp.eq.s32.totalorder %s23, 3
      %p78 = por %p76, %p77
      %p79 = scmp.ne.s32.totalorder %s71, %s74
      %p80 = scmp.eq.s32.totalorder %s23, 0
      %p81 = por %p79, %p80
      %p82 = scmp.ne.s32.totalorder %s71, %s74
      %p83 = scmp.eq.s32.totalorder %s28, 3
      %p84 = por %p82, %p83
      %p85 = scmp.ne.s32.totalorder %s74, %s75
      %p86 = scmp.eq.s32.totalorder %s28, 0
      %p87 = por %p85, %p86
      %p88 = scmp.ne.s32.totalorder %s74, %s75
      %p89 = scmp.eq.s32.totalorder %s29, 3
      %p90 = por %p88, %p89
      %p92 = scmp.ne.s32.totalorder %s75, %s91
      %p93 = scmp.eq.s32.totalorder %s29, 0
      %p94 = por %p92, %p93
      %s95 = ssub.s32 %s31, %s38
      %p96 = scmp.eq.s32.totalorder %s95, 0
      %s98 = sadd.s32 %s97, 1
      %s99 = scalar_select %p96, %s97, %s98
      %p102 = pneg %p96
      %p103 = scmp.eq.s32.totalorder %s23, 3
      %p104 = por %p102, %p103
      %p105 = scmp.ne.s32.totalorder %s97, %s100
      %p106 = scmp.eq.s32.totalorder %s23, 0
      %p107 = por %p105, %p106
      %p108 = scmp.ne.s32.totalorder %s97, %s100
      %p109 = scmp.eq.s32.totalorder %s28, 3
      %p110 = por %p108, %p109
      %p111 = scmp.ne.s32.totalorder %s100, %s101
      %p112 = scmp.eq.s32.totalorder %s28, 0
      %p113 = por %p111, %p112
      %p114 = scmp.ne.s32.totalorder %s100, %s101
      %p115 = scmp.eq.s32.totalorder %s29, 3
      %p116 = por %p114, %p115
      %p118 = scmp.ne.s32.totalorder %s101, %s117
      %p119 = scmp.eq.s32.totalorder %s29, 0
      %p120 = por %p118, %p119
      %s121 = ssub.s32 %s31, %s38
      %p122 = scmp.eq.s32.totalorder %s121, 0
      %s124 = sadd.s32 %s123, 1
      %s125 = scalar_select %p122, %s123, %s124
      %p128 = pneg %p122
      %p129 = scmp.eq.s32.totalorder %s23, 3
      %p130 = por %p128, %p129
      %p131 = scmp.ne.s32.totalorder %s123, %s126
      %p132 = scmp.eq.s32.totalorder %s23, 0
      %p133 = por %p131, %p132
      %p134 = scmp.ne.s32.totalorder %s123, %s126
      %p135 = scmp.eq.s32.totalorder %s28, 3
      %p136 = por %p134, %p135
      %p137 = scmp.ne.s32.totalorder %s126, %s127
      %p138 = scmp.eq.s32.totalorder %s28, 0
      %p139 = por %p137, %p138
      %p140 = scmp.ne.s32.totalorder %s126, %s127
      %p141 = scmp.eq.s32.totalorder %s29, 3
      %p142 = por %p140, %p141
      %p144 = scmp.ne.s32.totalorder %s127, %s143
      %p145 = scmp.eq.s32.totalorder %s29, 0
      %p146 = por %p144, %p145
      %s147 = ssub.s32 %s31, %s38
      %p148 = scmp.eq.s32.totalorder %s147, 0
      %s150 = sadd.s32 %s149, 1
      %s151 = scalar_select %p148, %s149, %s150
      %p154 = pneg %p148
      %p155 = scmp.eq.s32.totalorder %s23, 3
      %p156 = por %p154, %p155
      %p157 = scmp.ne.s32.totalorder %s149, %s152
      %p158 = scmp.eq.s32.totalorder %s23, 0
      %p159 = por %p157, %p158
      %p160 = scmp.ne.s32.totalorder %s149, %s152
      %p161 = scmp.eq.s32.totalorder %s28, 3
      %p162 = por %p160, %p161
      %p163 = scmp.ne.s32.totalorder %s152, %s153
      %p164 = scmp.eq.s32.totalorder %s28, 0
      %p165 = por %p163, %p164
      %p166 = scmp.ne.s32.totalorder %s152, %s153
      %p167 = scmp.eq.s32.totalorder %s29, 3
      %p168 = por %p166, %p167
      %p170 = scmp.ne.s32.totalorder %s153, %s169
      %p171 = scmp.eq.s32.totalorder %s29, 0
      %p172 = por %p170, %p171
      %s173 = ssub.s32 %s31, %s38
      %p174 = scmp.eq.s32.totalorder %s173, 0
      %s176 = sadd.s32 %s175, 1
      %s177 = scalar_select %p174, %s175, %s176
      %p180 = pneg %p174
      %p181 = scmp.eq.s32.totalorder %s23, 3
      %p182 = por %p180, %p181
      %p183 = scmp.ne.s32.totalorder %s175, %s178
      %p184 = scmp.eq.s32.totalorder %s23, 0
      %p185 = por %p183, %p184
      %p186 = scmp.ne.s32.totalorder %s175, %s178
      %p187 = scmp.eq.s32.totalorder %s28, 3
      %p188 = por %p186, %p187
      %p189 = scmp.ne.s32.totalorder %s178, %s179
      %p190 = scmp.eq.s32.totalorder %s28, 0
      %p191 = por %p189, %p190
      %p192 = scmp.ne.s32.totalorder %s178, %s179
      %p193 = scmp.eq.s32.totalorder %s29, 3
      %p194 = por %p192, %p193
      %p196 = scmp.ne.s32.totalorder %s179, %s195
      %p197 = scmp.eq.s32.totalorder %s29, 0
      %p198 = por %p196, %p197
      %s199 = ssub.s32 %s31, %s38
      %p200 = scmp.eq.s32.totalorder %s199, 0
      %s202 = sadd.s32 %s201, 1
      %s203 = scalar_select %p200, %s201, %s202
      %p206 = pneg %p200
      %p207 = scmp.eq.s32.totalorder %s23, 3
      %p208 = por %p206, %p207
      %p209 = scmp.ne.s32.totalorder %s201, %s204
      %p210 = scmp.eq.s32.totalorder %s23, 0
      %p211 = por %p209, %p210
      %p212 = scmp.ne.s32.totalorder %s201, %s204
      %p213 = scmp.eq.s32.totalorder %s28, 3
      %p214 = por %p212, %p213
      %p215 = scmp.ne.s32.totalorder %s204, %s205
      %p216 = scmp.eq.s32.totalorder %s28, 0
      %p217 = por %p215, %p216
      %p218 = scmp.ne.s32.totalorder %s204, %s205
      %p219 = scmp.eq.s32.totalorder %s29, 3
      %p220 = por %p218, %p219
      %p222 = scmp.ne.s32.totalorder %s205, %s221
      %p223 = scmp.eq.s32.totalorder %s29, 0
      %p224 = por %p222, %p223
      %s225 = ssub.s32 %s31, %s38
      %p226 = scmp.eq.s32.totalorder %s225, 0
      %s228 = sadd.s32 %s227, 1
      %s229 = scalar_select %p226, %s227, %s228
      %p232 = pneg %p226
      %p233 = scmp.eq.s32.totalorder %s23, 3
      %p234 = por %p232, %p233
      %p235 = scmp.ne.s32.totalorder %s227, %s230
      %p236 = scmp.eq.s32.totalorder %s23, 0
      %p237 = por %p235, %p236
      %p238 = scmp.ne.s32.totalorder %s227, %s230
      %p239 = scmp.eq.s32.totalorder %s28, 3
      %p240 = por %p238, %p239
      %p241 = scmp.ne.s32.totalorder %s230, %s231
      %p242 = scmp.eq.s32.totalorder %s28, 0
      %p243 = por %p241, %p242
      %p244 = scmp.ne.s32.totalorder %s230, %s231
      %p245 = scmp.eq.s32.totalorder %s29, 3
      %p246 = por %p244, %p245
      %p248 = scmp.ne.s32.totalorder %s231, %s247
      %p249 = scmp.eq.s32.totalorder %s29, 0
      %p250 = por %p248, %p249
      %s251 = ssub.s32 %s31, %s38
      %p252 = scmp.eq.s32.totalorder %s251, 0
      %s254 = sadd.s32 %s253, 1
      %s255 = scalar_select %p252, %s253, %s254
      %p258 = pneg %p252
      %p259 = scmp.eq.s32.totalorder %s23, 3
      %p260 = por %p258, %p259
      %p261 = scmp.ne.s32.totalorder %s253, %s256
      %p262 = scmp.eq.s32.totalorder %s23, 0
      %p263 = por %p261, %p262
      %p264 = scmp.ne.s32.totalorder %s253, %s256
      %p265 = scmp.eq.s32.totalorder %s28, 3
      %p266 = por %p264, %p265
      %p267 = scmp.ne.s32.totalorder %s256, %s257
      %p268 = scmp.eq.s32.totalorder %s28, 0
      %p269 = por %p267, %p268
      %p270 = scmp.ne.s32.totalorder %s256, %s257
      %p271 = scmp.eq.s32.totalorder %s29, 3
      %p272 = por %p270, %p271
      %p274 = scmp.ne.s32.totalorder %s257, %s273
      %p275 = scmp.eq.s32.totalorder %s29, 0
      %p276 = por %p274, %p275
      %s277 = ssub.s32 %s31, %s38
      %p278 = scmp.eq.s32.totalorder %s277, 0
      %s280 = sadd.s32 %s279, 1
      %s281 = scalar_select %p278, %s279, %s280
      %p284 = pneg %p278
      %p285 = scmp.eq.s32.totalorder %s23, 3
      %p286 = por %p284, %p285
      %p287 = scmp.ne.s32.totalorder %s279, %s282
      %p288 = scmp.eq.s32.totalorder %s23, 0
      %p289 = por %p287, %p288
      %p290 = scmp.ne.s32.totalorder %s279, %s282
      %p291 = scmp.eq.s32.totalorder %s28, 3
      %p292 = por %p290, %p291
      %p293 = scmp.ne.s32.totalorder %s282, %s283
      %p294 = scmp.eq.s32.totalorder %s28, 0
      %p295 = por %p293, %p294
      %p296 = scmp.ne.s32.totalorder %s282, %s283
      %p297 = scmp.eq.s32.totalorder %s29, 3
      %p298 = por %p296, %p297
      %p300 = scmp.ne.s32.totalorder %s283, %s299
      %p301 = scmp.eq.s32.totalorder %s29, 0
      %p302 = por %p300, %p301
      %s303 = ssub.s32 %s31, %s38
      %p304 = scmp.eq.s32.totalorder %s303, 0
      %s306 = sadd.s32 %s305, 1
      %s307 = scalar_select %p304, %s305, %s306
      %p310 = pneg %p304
      %p311 = scmp.eq.s32.totalorder %s23, 3
      %p312 = por %p310, %p311
      %p313 = scmp.ne.s32.totalorder %s305, %s308
      %p314 = scmp.eq.s32.totalorder %s23, 0
      %p315 = por %p313, %p314
      %p316 = scmp.ne.s32.totalorder %s305, %s308
      %p317 = scmp.eq.s32.totalorder %s28, 3
      %p318 = por %p316, %p317
      %p319 = scmp.ne.s32.totalorder %s308, %s309
      %p320 = scmp.eq.s32.totalorder %s28, 0
      %p321 = por %p319, %p320
      %p322 = scmp.ne.s32.totalorder %s308, %s309
      %p323 = scmp.eq.s32.totalorder %s29, 3
      %p324 = por %p322, %p323
      %p326 = scmp.ne.s32.totalorder %s309, %s325
      %p327 = scmp.eq.s32.totalorder %s29, 0
      %p328 = por %p326, %p327
      %s329 = ssub.s32 %s31, %s38
      %p330 = scmp.eq.s32.totalorder %s329, 0
      %s332 = sadd.s32 %s331, 1
      %s333 = scalar_select %p330, %s331, %s332
      %p336 = pneg %p330
      %p337 = scmp.eq.s32.totalorder %s23, 3
      %p338 = por %p336, %p337
      %p339 = scmp.ne.s32.totalorder %s331, %s334
      %p340 = scmp.eq.s32.totalorder %s23, 0
      %p341 = por %p339, %p340
      %p342 = scmp.ne.s32.totalorder %s331, %s334
      %p343 = scmp.eq.s32.totalorder %s28, 3
      %p344 = por %p342, %p343
      %p345 = scmp.ne.s32.totalorder %s334, %s335
      %p346 = scmp.eq.s32.totalorder %s28, 0
      %p347 = por %p345, %p346
      %p348 = scmp.ne.s32.totalorder %s334, %s335
      %p349 = scmp.eq.s32.totalorder %s29, 3
      %p350 = por %p348, %p349
      %p352 = scmp.ne.s32.totalorder %s335, %s351
      %p353 = scmp.eq.s32.totalorder %s29, 0
      %p354 = por %p352, %p353
      %s355 = ssub.s32 %s31, %s38
      %p356 = scmp.eq.s32.totalorder %s355, 0
      %s358 = sadd.s32 %s357, 1
      %s359 = scalar_select %p356, %s357, %s358
      %p362 = pneg %p356
      %p363 = scmp.eq.s32.totalorder %s23, 3
      %p364 = por %p362, %p363
      %p365 = scmp.ne.s32.totalorder %s357, %s360
      %p366 = scmp.eq.s32.totalorder %s23, 0
      %p367 = por %p365, %p366
      %p368 = scmp.ne.s32.totalorder %s357, %s360
      %p369 = scmp.eq.s32.totalorder %s28, 3
      %p370 = por %p368, %p369
      %p371 = scmp.ne.s32.totalorder %s360, %s361
      %p372 = scmp.eq.s32.totalorder %s28, 0
      %p373 = por %p371, %p372
      %p374 = scmp.ne.s32.totalorder %s360, %s361
      %p375 = scmp.eq.s32.totalorder %s29, 3
      %p376 = por %p374, %p375
      %p378 = scmp.ne.s32.totalorder %s361, %s377
      %p379 = scmp.eq.s32.totalorder %s29, 0
      %p380 = por %p378, %p379
      %s381 = ssub.s32 %s31, %s38
      %p382 = scmp.eq.s32.totalorder %s381, 0
      %s384 = sadd.s32 %s383, 1
      %s385 = scalar_select %p382, %s383, %s384
      %p388 = pneg %p382
      %p389 = scmp.eq.s32.totalorder %s23, 3
      %p390 = por %p388, %p389
      %p391 = scmp.ne.s32.totalorder %s383, %s386
      %p392 = scmp.eq.s32.totalorder %s23, 0
      %p393 = por %p391, %p392
      %p394 = scmp.ne.s32.totalorder %s383, %s386
      %p395 = scmp.eq.s32.totalorder %s28, 3
      %p396 = por %p394, %p395
      %p397 = scmp.ne.s32.totalorder %s386, %s387
      %p398 = scmp.eq.s32.totalorder %s28, 0
      %p399 = por %p397, %p398
      %p400 = scmp.ne.s32.totalorder %s386, %s387
      %p401 = scmp.eq.s32.totalorder %s29, 3
      %p402 = por %p400, %p401
      %p404 = scmp.ne.s32.totalorder %s387, %s403
      %p405 = scmp.eq.s32.totalorder %s29, 0
      %p406 = por %p404, %p405
      %s407 = ssub.s32 %s30, %s42
      %p408 = scmp.eq.s32.totalorder %s407, 0
      %s410 = sadd.s32 %s409, 1
      %s411 = scalar_select %p408, %s409, %s410
      %p414 = pneg %p408
      %p415 = scmp.eq.s32.totalorder %s23, 3
      %p416 = por %p414, %p415
      %p417 = scmp.ne.s32.totalorder %s409, %s412
      %p418 = scmp.eq.s32.totalorder %s23, 0
      %p419 = por %p417, %p418
      %p420 = scmp.ne.s32.totalorder %s409, %s412
      %p421 = scmp.eq.s32.totalorder %s28, 3
      %p422 = por %p420, %p421
      %p423 = scmp.ne.s32.totalorder %s412, %s413
      %p424 = scmp.eq.s32.totalorder %s28, 0
      %p425 = por %p423, %p424
      %p426 = scmp.ne.s32.totalorder %s412, %s413
      %p427 = scmp.eq.s32.totalorder %s29, 3
      %p428 = por %p426, %p427
      %p430 = scmp.ne.s32.totalorder %s413, %s429
      %p431 = scmp.eq.s32.totalorder %s29, 0
      %p432 = por %p430, %p431
      %p433 = scmp.le.s32.totalorder 1, %s23
      %p434 = scmp.lt.s32.totalorder %s23, 5
      %p435 = pnand %p433, %p434
      %p436 = pneg %p435
      // Predicated region
      $region9: #{tpu_custom_call.1} parent=5 // pred_check
        _
      $region10: #{tpu_custom_call.1} parent=5 // pred_check_branch
        %438 = sbr.rel (%p435) target = $region12
      $region11: #{tpu_custom_call.1} parent=5 // pred_region
        %s439 = ssub.s32 %s23, 1
      $region12: #{tpu_custom_call.1} parent=5 // pred_fallthru
        _
      %p440 = scmp.lt.s32.totalorder %s23, 4
      // Predicated region
      $region13: #{tpu_custom_call.1} parent=5 // pred_check
        %p441 = pneg %p440
      $region14: #{tpu_custom_call.1} parent=5 // pred_check_branch
        %443 = sbr.rel (%p441) target = $region16
      $region15: #{tpu_custom_call.1} parent=5 // pred_region
        // Predicated region
        $region17: #{tpu_custom_call.1} parent=15 // pred_check
          %p444 = pneg %p55
        $region18: #{tpu_custom_call.1} parent=15 // pred_check_branch
          %446 = sbr.rel (%p444) target = $region20
        $region19: #{tpu_custom_call.1} parent=15 // pred_region
          %p447 = scmp.lt.s32.totalorder %s30, 1
          %s448 = scalar_select %p447, %s30, 1
          %s449 = smul.addr %s448, 8
          %s450 = scalar_lea.vmem %s0, %s449
        $region20: #{tpu_custom_call.1} parent=15 // pred_fallthru
          _
        // Predicated region
        $region21: #{tpu_custom_call.1} parent=15 // pred_check
          %p451 = pneg %p81
        $region22: #{tpu_custom_call.1} parent=15 // pred_check_branch
          %453 = sbr.rel (%p451) target = $region24
        $region23: #{tpu_custom_call.1} parent=15 // pred_region
          %p454 = scmp.lt.s32.totalorder %s31, 1
          %s455 = scalar_select %p454, %s31, 1
          %s456 = scalar_lea.vmem %s1, %s455
        $region24: #{tpu_custom_call.1} parent=15 // pred_fallthru
          _
        // Predicated region
        $region25: #{tpu_custom_call.1} parent=15 // pred_check
          %p457 = pneg %p107
        $region26: #{tpu_custom_call.1} parent=15 // pred_check_branch
          %459 = sbr.rel (%p457) target = $region28
        $region27: #{tpu_custom_call.1} parent=15 // pred_region
          %p460 = scmp.lt.s32.totalorder %s31, 1
          %s461 = scalar_select %p460, %s31, 1
          %s462 = scalar_lea.vmem %s2, %s461
        $region28: #{tpu_custom_call.1} parent=15 // pred_fallthru
          _
        // Predicated region
        $region29: #{tpu_custom_call.1} parent=15 // pred_check
          %p463 = pneg %p133
        $region30: #{tpu_custom_call.1} parent=15 // pred_check_branch
          %465 = sbr.rel (%p463) target = $region32
        $region31: #{tpu_custom_call.1} parent=15 // pred_region
          %p466 = scmp.lt.s32.totalorder %s31, 1
          %s467 = scalar_select %p466, %s31, 1
          %s468 = smul.addr %s467, 16
          %s469 = smul.addr %s468, 4
          %s470 = scalar_lea.vmem %s3, %s469
        $region32: #{tpu_custom_call.1} parent=15 // pred_fallthru
          _
        // Predicated region
        $region33: #{tpu_custom_call.1} parent=15 // pred_check
          %p471 = pneg %p159
        $region34: #{tpu_custom_call.1} parent=15 // pred_check_branch
          %473 = sbr.rel (%p471) target = $region36
        $region35: #{tpu_custom_call.1} parent=15 // pred_region
          %p474 = scmp.lt.s32.totalorder %s31, 1
          %s475 = scalar_select %p474, %s31, 1
          %s476 = smul.addr %s475, 16
          %s477 = smul.addr %s476, 4
          %s478 = scalar_lea.vmem %s4, %s477
        $region36: #{tpu_custom_call.1} parent=15 // pred_fallthru
          _
        // Predicated region
        $region37: #{tpu_custom_call.1} parent=15 // pred_check
          %p479 = pneg %p185
        $region38: #{tpu_custom_call.1} parent=15 // pred_check_branch
          %481 = sbr.rel (%p479) target = $region40
        $region39: #{tpu_custom_call.1} parent=15 // pred_region
          %p482 = scmp.lt.s32.totalorder %s31, 1
          %s483 = scalar_select %p482, %s31, 1
          %s484 = smul.addr %s483, 16
          %s485 = smul.addr %s484, 4
          %s486 = scalar_lea.vmem %s5, %s485
        $region40: #{tpu_custom_call.1} parent=15 // pred_fallthru
          _
        // Predicated region
        $region41: #{tpu_custom_call.1} parent=15 // pred_check
          %p487 = pneg %p211
        $region42: #{tpu_custom_call.1} parent=15 // pred_check_branch
          %489 = sbr.rel (%p487) target = $region44
        $region43: #{tpu_custom_call.1} parent=15 // pred_region
          %p490 = scmp.lt.s32.totalorder %s31, 1
          %s491 = scalar_select %p490, %s31, 1
          %s492 = smul.addr %s491, 4
          %s493 = smul.addr %s492, 4
          %s494 = scalar_lea.vmem %s6, %s493
        $region44: #{tpu_custom_call.1} parent=15 // pred_fallthru
          _
        // Predicated region
        $region45: #{tpu_custom_call.1} parent=15 // pred_check
          %p495 = pneg %p237
        $region46: #{tpu_custom_call.1} parent=15 // pred_check_branch
          %497 = sbr.rel (%p495) target = $region48
        $region47: #{tpu_custom_call.1} parent=15 // pred_region
          %p498 = scmp.lt.s32.totalorder %s31, 1
          %s499 = scalar_select %p498, %s31, 1
          %s500 = scalar_lea.vmem %s7, %s499
        $region48: #{tpu_custom_call.1} parent=15 // pred_fallthru
          _
        // Predicated region
        $region49: #{tpu_custom_call.1} parent=15 // pred_check
          %p501 = pneg %p263
        $region50: #{tpu_custom_call.1} parent=15 // pred_check_branch
          %503 = sbr.rel (%p501) target = $region52
        $region51: #{tpu_custom_call.1} parent=15 // pred_region
          %p504 = scmp.lt.s32.totalorder %s31, 1
          %s505 = scalar_select %p504, %s31, 1
          %s506 = scalar_lea.vmem %s8, %s505
        $region52: #{tpu_custom_call.1} parent=15 // pred_fallthru
          _
        // Predicated region
        $region53: #{tpu_custom_call.1} parent=15 // pred_check
          %p507 = pneg %p289
        $region54: #{tpu_custom_call.1} parent=15 // pred_check_branch
          %509 = sbr.rel (%p507) target = $region56
        $region55: #{tpu_custom_call.1} parent=15 // pred_region
          %p510 = scmp.lt.s32.totalorder %s31, 1
          %s511 = scalar_select %p510, %s31, 1
          %s512 = scalar_lea.vmem %s9, %s511
        $region56: #{tpu_custom_call.1} parent=15 // pred_fallthru
          _
        // Predicated region
        $region57: #{tpu_custom_call.1} parent=15 // pred_check
          %p513 = pneg %p315
        $region58: #{tpu_custom_call.1} parent=15 // pred_check_branch
          %515 = sbr.rel (%p513) target = $region60
        $region59: #{tpu_custom_call.1} parent=15 // pred_region
          %p516 = scmp.lt.s32.totalorder %s31, 1
          %s517 = scalar_select %p516, %s31, 1
          %s518 = smul.addr %s517, 4
          %s519 = smul.addr %s518, 4
          %s520 = scalar_lea.vmem %s10, %s519
        $region60: #{tpu_custom_call.1} parent=15 // pred_fallthru
          _
        // Predicated region
        $region61: #{tpu_custom_call.1} parent=15 // pred_check
          %p521 = pneg %p341
        $region62: #{tpu_custom_call.1} parent=15 // pred_check_branch
          %523 = sbr.rel (%p521) target = $region64
        $region63: #{tpu_custom_call.1} parent=15 // pred_region
          %p524 = scmp.lt.s32.totalorder %s31, 1
          %s525 = scalar_select %p524, %s31, 1
          %s526 = scalar_lea.vmem %s11, %s525
        $region64: #{tpu_custom_call.1} parent=15 // pred_fallthru
          _
        // Predicated region
        $region65: #{tpu_custom_call.1} parent=15 // pred_check
          %p527 = pneg %p367
        $region66: #{tpu_custom_call.1} parent=15 // pred_check_branch
          %529 = sbr.rel (%p527) target = $region68
        $region67: #{tpu_custom_call.1} parent=15 // pred_region
          %p530 = scmp.lt.s32.totalorder %s31, 1
          %s531 = scalar_select %p530, %s31, 1
          %s532 = smul.addr %s531, 8
          %s533 = smul.addr %s532, 4
          %s534 = scalar_lea.vmem %s12, %s533
        $region68: #{tpu_custom_call.1} parent=15 // pred_fallthru
          _
        // Predicated region
        $region69: #{tpu_custom_call.1} parent=15 // pred_check
          %p535 = pneg %p393
        $region70: #{tpu_custom_call.1} parent=15 // pred_check_branch
          %537 = sbr.rel (%p535) target = $region72
        $region71: #{tpu_custom_call.1} parent=15 // pred_region
          %p538 = scmp.lt.s32.totalorder %s31, 1
          %s539 = scalar_select %p538, %s31, 1
          %s540 = scalar_lea.vmem %s13, %s539
        $region72: #{tpu_custom_call.1} parent=15 // pred_fallthru
          _
      $region16: #{tpu_custom_call.1} parent=5 // pred_fallthru
        _
      %p541 = scmp.le.s32.totalorder 1, %s23
      %p542 = scmp.lt.s32.totalorder %s23, 5
      %p543 = pnand %p541, %p542
      %p544 = pneg %p543
      // Predicated region
      $region73: #{tpu_custom_call.1} parent=5 // pred_check
        _
      $region74: #{tpu_custom_call.1} parent=5 // pred_check_branch
        %546 = sbr.rel (%p543) target = $region76
      $region75: #{tpu_custom_call.1} parent=5 // pred_region
        %s547 = ssub.s32 %s23, 1
        %p548 = scmp.lt.s32.totalorder %s32, 1
        %s549 = scalar_select %p548, %s32, 1
        %s550 = smul.addr %s549, 8
        %s551 = scalar_lea.vmem %s0, %s550
        %p552 = pneg %p61
        %p553 = pneg %p58
        %p554 = scmp.lt.s32.totalorder %s33, 1
        %s555 = scalar_select %p554, %s33, 1
        %s556 = scalar_lea.vmem %s1, %s555
        %p557 = pneg %p87
        %p558 = pneg %p84
        %p559 = scmp.lt.s32.totalorder %s33, 1
        %s560 = scalar_select %p559, %s33, 1
        %s561 = scalar_lea.vmem %s2, %s560
        %p562 = pneg %p113
        %p563 = pneg %p110
        %p564 = scmp.lt.s32.totalorder %s33, 1
        %s565 = scalar_select %p564, %s33, 1
        %s566 = smul.addr %s565, 16
        %s567 = smul.addr %s566, 4
        %s568 = scalar_lea.vmem %s3, %s567
        %p569 = pneg %p139
        %p570 = pneg %p136
        %p571 = scmp.lt.s32.totalorder %s33, 1
        %s572 = scalar_select %p571, %s33, 1
        %s573 = smul.addr %s572, 16
        %s574 = smul.addr %s573, 4
        %s575 = scalar_lea.vmem %s4, %s574
        %p576 = pneg %p165
        %p577 = pneg %p162
        %p578 = scmp.lt.s32.totalorder %s33, 1
        %s579 = scalar_select %p578, %s33, 1
        %s580 = smul.addr %s579, 16
        %s581 = smul.addr %s580, 4
        %s582 = scalar_lea.vmem %s5, %s581
        %p583 = pneg %p191
        %p584 = pneg %p188
        %p585 = scmp.lt.s32.totalorder %s33, 1
        %s586 = scalar_select %p585, %s33, 1
        %s587 = smul.addr %s586, 4
        %s588 = smul.addr %s587, 4
        %s589 = scalar_lea.vmem %s6, %s588
        %p590 = pneg %p217
        %p591 = pneg %p214
        %p592 = scmp.lt.s32.totalorder %s33, 1
        %s593 = scalar_select %p592, %s33, 1
        %s594 = scalar_lea.vmem %s7, %s593
        %p595 = pneg %p243
        %p596 = pneg %p240
        %p597 = scmp.lt.s32.totalorder %s33, 1
        %s598 = scalar_select %p597, %s33, 1
        %s599 = scalar_lea.vmem %s8, %s598
        %p600 = pneg %p269
        %p601 = pneg %p266
        %p602 = scmp.lt.s32.totalorder %s33, 1
        %s603 = scalar_select %p602, %s33, 1
        %s604 = scalar_lea.vmem %s9, %s603
        %p605 = pneg %p295
        %p606 = pneg %p292
        %p607 = scmp.lt.s32.totalorder %s33, 1
        %s608 = scalar_select %p607, %s33, 1
        %s609 = smul.addr %s608, 4
        %s610 = smul.addr %s609, 4
        %s611 = scalar_lea.vmem %s10, %s610
        %p612 = pneg %p321
        %p613 = pneg %p318
        %p614 = scmp.lt.s32.totalorder %s33, 1
        %s615 = scalar_select %p614, %s33, 1
        %s616 = scalar_lea.vmem %s11, %s615
        %p617 = pneg %p347
        %p618 = pneg %p344
        %p619 = scmp.lt.s32.totalorder %s33, 1
        %s620 = scalar_select %p619, %s33, 1
        %s621 = smul.addr %s620, 8
        %s622 = smul.addr %s621, 4
        %s623 = scalar_lea.vmem %s12, %s622
        %p624 = pneg %p373
        %p625 = pneg %p370
        %p626 = scmp.lt.s32.totalorder %s33, 1
        %s627 = scalar_select %p626, %s33, 1
        %s628 = scalar_lea.vmem %s13, %s627
        %p629 = pneg %p399
        %p630 = pneg %p396
        %p631 = pneg %p425
        %p632 = pneg %p422
        %s633 = sand.u32 %s412, 1
        %s634 = scalar_lea.sflag [#allocation4], %s633
        %s635 = sand.u32 %s412, 1
        %s636 = smul.addr %s635, 8
        %s637 = scalar_lea.vmem [#allocation3], %s636
        %p638 = scmp.lt.s32.totalorder %s32, 1
        %s639 = scalar_select %p638, %s32, 1
        %s640 = smul.addr %s639, 8
        %s641 = scalar_lea.vmem %s0, %s640
        %p642 = scmp.lt.s32.totalorder %s33, 1
        %s643 = scalar_select %p642, %s33, 1
        %s644 = scalar_lea.vmem %s1, %s643
        %p645 = scmp.lt.s32.totalorder %s33, 1
        %s646 = scalar_select %p645, %s33, 1
        %s647 = scalar_lea.vmem %s2, %s646
        %p648 = scmp.lt.s32.totalorder %s33, 1
        %s649 = scalar_select %p648, %s33, 1
        %s650 = smul.addr %s649, 16
        %s651 = smul.addr %s650, 4
        %s652 = scalar_lea.vmem %s3, %s651
        %p653 = scmp.lt.s32.totalorder %s33, 1
        %s654 = scalar_select %p653, %s33, 1
        %s655 = smul.addr %s654, 16
        %s656 = smul.addr %s655, 4
        %s657 = scalar_lea.vmem %s4, %s656
        %p658 = scmp.lt.s32.totalorder %s33, 1
        %s659 = scalar_select %p658, %s33, 1
        %s660 = smul.addr %s659, 16
        %s661 = smul.addr %s660, 4
        %s662 = scalar_lea.vmem %s5, %s661
        %p663 = scmp.lt.s32.totalorder %s33, 1
        %s664 = scalar_select %p663, %s33, 1
        %s665 = smul.addr %s664, 4
        %s666 = smul.addr %s665, 4
        %s667 = scalar_lea.vmem %s6, %s666
        %p668 = scmp.lt.s32.totalorder %s33, 1
        %s669 = scalar_select %p668, %s33, 1
        %s670 = scalar_lea.vmem %s7, %s669
        %p671 = scmp.lt.s32.totalorder %s33, 1
        %s672 = scalar_select %p671, %s33, 1
        %s673 = scalar_lea.vmem %s8, %s672
        %p674 = scmp.lt.s32.totalorder %s33, 1
        %s675 = scalar_select %p674, %s33, 1
        %s676 = scalar_lea.vmem %s9, %s675
        %p677 = scmp.lt.s32.totalorder %s33, 1
        %s678 = scalar_select %p677, %s33, 1
        %s679 = smul.addr %s678, 4
        %s680 = smul.addr %s679, 4
        %s681 = scalar_lea.vmem %s10, %s680
        %p682 = scmp.lt.s32.totalorder %s33, 1
        %s683 = scalar_select %p682, %s33, 1
        %s684 = scalar_lea.vmem %s11, %s683
        %p685 = scmp.lt.s32.totalorder %s33, 1
        %s686 = scalar_select %p685, %s33, 1
        %s687 = smul.addr %s686, 8
        %s688 = smul.addr %s687, 4
        %s689 = scalar_lea.vmem %s12, %s688
        %p690 = scmp.lt.s32.totalorder %s33, 1
        %s691 = scalar_select %p690, %s33, 1
        %s692 = scalar_lea.vmem %s13, %s691
        %p694 = scmp.eq.s32.totalorder %s33, 0
        // Predicated region
        $region77: #{tpu_custom_call.1} parent=75 // pred_check
          %p695 = pneg %p694
        $region78: #{tpu_custom_call.1} parent=75 // pred_check_branch
          %697 = sbr.rel (%p695) target = $region80
        $region79: #{tpu_custom_call.1} parent=75 // pred_region
          %v698 = vld [vmem:[%s641] sm:$0xff]
          %vm699 = vcmask 261120
          %700 = vst.msk [vmem:[#allocation2] sm:$0xff] %vm699, %v698
        $region80: #{tpu_custom_call.1} parent=75 // pred_fallthru
          _
        %v701 = vld [vmem:[#allocation2] sm:$0xff]
        %v702 = vld [vmem:[%s644] sm:$0x1]
        %v703 = vld [vmem:[%s647] sm:$0x1]
        %vm704 = vcmask 261120
        %v705 = vsel %vm704, %v701, 0.0
        %706 = vadd.xlane.f32.xlu0 %v705
        %v707 = vpop.xlane.xlu0 %706
        %v708 = vrcp.pop 32.0
        %v709 = vmul.f32 32.0, %v708
        %v710 = vsub.f32 1.0, %v709
        %v711 = vmul.f32 %v708, %v710
        %v712 = vadd.f32 %v708, %v711
        %vm713 = vweird.f32 %v708
        %v714 = vsel %vm713, %v708, %v712
        %v715 = vmul.f32 %v707, %v714
        %v716 = vsub.f32 %v701, %v715
        %v717 = vmul.f32 %v716, %v716
        %v718 = vsel %vm704, %v717, 0.0
        %719 = vadd.xlane.f32.xlu0 %v718
        %v720 = vpop.xlane.xlu0 %719
        %v721 = vmul.f32 %v720, %v714
        %v722 = vadd.f32 %v721, 1e-05
        %v723 = vrsqrt.pop %v722
        %v724 = vmul.f32 %v723, %v722
        %v725 = vmul.f32 %v724, %v723
        %v726 = vmul.f32 0.5, %v725
        %v727 = vsub.f32 1.5, %v726
        %v728 = vmul.f32 %v723, %v727
        %vm729 = vweird.f32 %v722
        %vm730 = vweird.f32 %v723
        %vm731 = vmor %vm729, %vm730
        %v732 = vsel %vm731, %v723, %v728
        %v733 = vmul.f32 %v716, %v732
        %v735 = vperm.slane %v702, 0
        %v737 = vmul.f32 %v733, %v735
        %v739 = vperm.slane %v703, 0
        %v741 = vadd.f32 %v737, %v739
        %v742 = vpack.c.bf16 %v741, %v741
        %v743 = vld [vmem:[%s652] sm:$0xf]
        %v744 = vld [vmem:[%s652 + $0x4] sm:$0xf]
        %v745 = vld [vmem:[%s652 + $0x8] sm:$0xf]
        %v746 = vld [vmem:[%s652 + $0xc] sm:$0xf]
        %v747 = vld [vmem:[%s652 + $0x10] sm:$0xf]
        %v748 = vld [vmem:[%s652 + $0x14] sm:$0xf]
        %v749 = vld [vmem:[%s652 + $0x18] sm:$0xf]
        %v750 = vld [vmem:[%s652 + $0x1c] sm:$0xf]
        %v751 = vld [vmem:[%s652 + $0x20] sm:$0xf]
        %v752 = vld [vmem:[%s652 + $0x24] sm:$0xf]
        %v753 = vld [vmem:[%s652 + $0x28] sm:$0xf]
        %v754 = vld [vmem:[%s652 + $0x2c] sm:$0xf]
        %v755 = vld [vmem:[%s652 + $0x30] sm:$0xf]
        %v756 = vld [vmem:[%s652 + $0x34] sm:$0xf]
        %v757 = vld [vmem:[%s652 + $0x38] sm:$0xf]
        %v758 = vld [vmem:[%s652 + $0x3c] sm:$0xf]
        %v763 = vunpack.c.l.b16 %v743
        %v764 = vunpack.c.l.b16 %v744
        %v765 = vunpack.c.l.b16 %v745
        %v766 = vunpack.c.l.b16 %v746
        %v767 = vpack.c.b16 %v764, %v763
        %v768 = vpack.c.b16 %v766, %v765
        %v772 = vsel %vm704, %v742, 0
        %774 = vmatpush.bf16.msra.mxu0 0
        %775 = vmatpush.bf16.msra.mxu0 0
        %776 = vmatpush.bf16.msra.mxu0 0
        %777 = vmatpush.bf16.msra.mxu0 0
        %778 = vmatpush.bf16.msra.mxu0 0
        %779 = vmatpush.bf16.msra.mxu0 0
        %780 = vmatpush.bf16.msra.mxu0 %v768
        %781 = vmatpush.bf16.msra.mxu0 %v767
        %782 = vmatmul.bf16.gmra.mxu0 %v772
        %v783 = vpop.f32.mrf.mxu0
        %v784 = vadd.f32 0.0, %v783
        %v785 = vpop.f32.mrf.mxu0
        %786 = vdwg.mxu0
        %v791 = vunpack.c.l.b16 %v747
        %v792 = vunpack.c.l.b16 %v748
        %v793 = vunpack.c.l.b16 %v749
        %v794 = vunpack.c.l.b16 %v750
        %v795 = vpack.c.b16 %v792, %v791
        %v796 = vpack.c.b16 %v794, %v793
        %799 = vmatpush.bf16.msra.mxu0 0
        %800 = vmatpush.bf16.msra.mxu0 0
        %801 = vmatpush.bf16.msra.mxu0 0
        %802 = vmatpush.bf16.msra.mxu0 0
        %803 = vmatpush.bf16.msra.mxu0 0
        %804 = vmatpush.bf16.msra.mxu0 0
        %805 = vmatpush.bf16.msra.mxu0 %v796
        %806 = vmatpush.bf16.msra.mxu0 %v795
        %807 = vmatmul.bf16.gmra.mxu0 %v772
        %v808 = vpop.f32.mrf.mxu0
        %v809 = vadd.f32 0.0, %v808
        %v810 = vpop.f32.mrf.mxu0
        %811 = vdwg.mxu0
        %v816 = vunpack.c.l.b16 %v751
        %v817 = vunpack.c.l.b16 %v752
        %v818 = vunpack.c.l.b16 %v753
        %v819 = vunpack.c.l.b16 %v754
        %v820 = vpack.c.b16 %v817, %v816
        %v821 = vpack.c.b16 %v819, %v818
        %824 = vmatpush.bf16.msra.mxu0 0
        %825 = vmatpush.bf16.msra.mxu0 0
        %826 = vmatpush.bf16.msra.mxu0 0
        %827 = vmatpush.bf16.msra.mxu0 0
        %828 = vmatpush.bf16.msra.mxu0 0
        %829 = vmatpush.bf16.msra.mxu0 0
        %830 = vmatpush.bf16.msra.mxu0 %v821
        %831 = vmatpush.bf16.msra.mxu0 %v820
        %832 = vmatmul.bf16.gmra.mxu0 %v772
        %v833 = vpop.f32.mrf.mxu0
        %v834 = vadd.f32 0.0, %v833
        %v835 = vpop.f32.mrf.mxu0
        %836 = vdwg.mxu0
        %v841 = vunpack.c.l.b16 %v755
        %v842 = vunpack.c.l.b16 %v756
        %v843 = vunpack.c.l.b16 %v757
        %v844 = vunpack.c.l.b16 %v758
        %v845 = vpack.c.b16 %v842, %v841
        %v846 = vpack.c.b16 %v844, %v843
        %849 = vmatpush.bf16.msra.mxu0 0
        %850 = vmatpush.bf16.msra.mxu0 0
        %851 = vmatpush.bf16.msra.mxu0 0
        %852 = vmatpush.bf16.msra.mxu0 0
        %853 = vmatpush.bf16.msra.mxu0 0
        %854 = vmatpush.bf16.msra.mxu0 0
        %855 = vmatpush.bf16.msra.mxu0 %v846
        %856 = vmatpush.bf16.msra.mxu0 %v845
        %857 = vmatmul.bf16.gmra.mxu0 %v772
        %v858 = vpop.f32.mrf.mxu0
        %v859 = vadd.f32 0.0, %v858
        %v860 = vpop.f32.mrf.mxu0
        %861 = vdwg.mxu0
        %v862 = vld [vmem:[%s657] sm:$0xf]
        %v863 = vld [vmem:[%s657 + $0x4] sm:$0xf]
        %v864 = vld [vmem:[%s657 + $0x8] sm:$0xf]
        %v865 = vld [vmem:[%s657 + $0xc] sm:$0xf]
        %v866 = vld [vmem:[%s657 + $0x10] sm:$0xf]
        %v867 = vld [vmem:[%s657 + $0x14] sm:$0xf]
        %v868 = vld [vmem:[%s657 + $0x18] sm:$0xf]
        %v869 = vld [vmem:[%s657 + $0x1c] sm:$0xf]
        %v870 = vld [vmem:[%s657 + $0x20] sm:$0xf]
        %v871 = vld [vmem:[%s657 + $0x24] sm:$0xf]
        %v872 = vld [vmem:[%s657 + $0x28] sm:$0xf]
        %v873 = vld [vmem:[%s657 + $0x2c] sm:$0xf]
        %v874 = vld [vmem:[%s657 + $0x30] sm:$0xf]
        %v875 = vld [vmem:[%s657 + $0x34] sm:$0xf]
        %v876 = vld [vmem:[%s657 + $0x38] sm:$0xf]
        %v877 = vld [vmem:[%s657 + $0x3c] sm:$0xf]
        %v882 = vunpack.c.l.b16 %v862
        %v883 = vunpack.c.l.b16 %v863
        %v884 = vunpack.c.l.b16 %v864
        %v885 = vunpack.c.l.b16 %v865
        %v886 = vpack.c.b16 %v883, %v882
        %v887 = vpack.c.b16 %v885, %v884
        %890 = vmatpush.bf16.msra.mxu0 0
        %891 = vmatpush.bf16.msra.mxu0 0
        %892 = vmatpush.bf16.msra.mxu0 0
        %893 = vmatpush.bf16.msra.mxu0 0
        %894 = vmatpush.bf16.msra.mxu0 0
        %895 = vmatpush.bf16.msra.mxu0 0
        %896 = vmatpush.bf16.msra.mxu0 %v887
        %897 = vmatpush.bf16.msra.mxu0 %v886
        %898 = vmatmul.bf16.gmra.mxu0 %v772
        %v899 = vpop.f32.mrf.mxu0
        %v900 = vadd.f32 0.0, %v899
        %v901 = vpop.f32.mrf.mxu0
        %902 = vdwg.mxu0
        %v907 = vunpack.c.l.b16 %v866
        %v908 = vunpack.c.l.b16 %v867
        %v909 = vunpack.c.l.b16 %v868
        %v910 = vunpack.c.l.b16 %v869
        %v911 = vpack.c.b16 %v908, %v907
        %v912 = vpack.c.b16 %v910, %v909
        %915 = vmatpush.bf16.msra.mxu0 0
        %916 = vmatpush.bf16.msra.mxu0 0
        %917 = vmatpush.bf16.msra.mxu0 0
        %918 = vmatpush.bf16.msra.mxu0 0
        %919 = vmatpush.bf16.msra.mxu0 0
        %920 = vmatpush.bf16.msra.mxu0 0
        %921 = vmatpush.bf16.msra.mxu0 %v912
        %922 = vmatpush.bf16.msra.mxu0 %v911
        %923 = vmatmul.bf16.gmra.mxu0 %v772
        %v924 = vpop.f32.mrf.mxu0
        %v925 = vadd.f32 0.0, %v924
        %v926 = vpop.f32.mrf.mxu0
        %927 = vdwg.mxu0
        %v932 = vunpack.c.l.b16 %v870
        %v933 = vunpack.c.l.b16 %v871
        %v934 = vunpack.c.l.b16 %v872
        %v935 = vunpack.c.l.b16 %v873
        %v936 = vpack.c.b16 %v933, %v932
        %v937 = vpack.c.b16 %v935, %v934
        %940 = vmatpush.bf16.msra.mxu0 0
        %941 = vmatpush.bf16.msra.mxu0 0
        %942 = vmatpush.bf16.msra.mxu0 0
        %943 = vmatpush.bf16.msra.mxu0 0
        %944 = vmatpush.bf16.msra.mxu0 0
        %945 = vmatpush.bf16.msra.mxu0 0
        %946 = vmatpush.bf16.msra.mxu0 %v937
        %947 = vmatpush.bf16.msra.mxu0 %v936
        %948 = vmatmul.bf16.gmra.mxu0 %v772
        %v949 = vpop.f32.mrf.mxu0
        %v950 = vadd.f32 0.0, %v949
        %v951 = vpop.f32.mrf.mxu0
        %952 = vdwg.mxu0
        %v957 = vunpack.c.l.b16 %v874
        %v958 = vunpack.c.l.b16 %v875
        %v959 = vunpack.c.l.b16 %v876
        %v960 = vunpack.c.l.b16 %v877
        %v961 = vpack.c.b16 %v958, %v957
        %v962 = vpack.c.b16 %v960, %v959
        %965 = vmatpush.bf16.msra.mxu0 0
        %966 = vmatpush.bf16.msra.mxu0 0
        %967 = vmatpush.bf16.msra.mxu0 0
        %968 = vmatpush.bf16.msra.mxu0 0
        %969 = vmatpush.bf16.msra.mxu0 0
        %970 = vmatpush.bf16.msra.mxu0 0
        %971 = vmatpush.bf16.msra.mxu0 %v962
        %972 = vmatpush.bf16.msra.mxu0 %v961
        %973 = vmatmul.bf16.gmra.mxu0 %v772
        %v974 = vpop.f32.mrf.mxu0
        %v975 = vadd.f32 0.0, %v974
        %v976 = vpop.f32.mrf.mxu0
        %977 = vdwg.mxu0
        %v978 = vld [vmem:[%s662] sm:$0xf]
        %v979 = vld [vmem:[%s662 + $0x4] sm:$0xf]
        %v980 = vld [vmem:[%s662 + $0x8] sm:$0xf]
        %v981 = vld [vmem:[%s662 + $0xc] sm:$0xf]
        %v982 = vld [vmem:[%s662 + $0x10] sm:$0xf]
        %v983 = vld [vmem:[%s662 + $0x14] sm:$0xf]
        %v984 = vld [vmem:[%s662 + $0x18] sm:$0xf]
        %v985 = vld [vmem:[%s662 + $0x1c] sm:$0xf]
        %v986 = vld [vmem:[%s662 + $0x20] sm:$0xf]
        %v987 = vld [vmem:[%s662 + $0x24] sm:$0xf]
        %v988 = vld [vmem:[%s662 + $0x28] sm:$0xf]
        %v989 = vld [vmem:[%s662 + $0x2c] sm:$0xf]
        %v990 = vld [vmem:[%s662 + $0x30] sm:$0xf]
        %v991 = vld [vmem:[%s662 + $0x34] sm:$0xf]
        %v992 = vld [vmem:[%s662 + $0x38] sm:$0xf]
        %v993 = vld [vmem:[%s662 + $0x3c] sm:$0xf]
        %v998 = vunpack.c.l.b16 %v978
        %v999 = vunpack.c.l.b16 %v979
        %v1000 = vunpack.c.l.b16 %v980
        %v1001 = vunpack.c.l.b16 %v981
        %v1002 = vpack.c.b16 %v999, %v998
        %v1003 = vpack.c.b16 %v1001, %v1000
        %1006 = vmatpush.bf16.msra.mxu0 0
        %1007 = vmatpush.bf16.msra.mxu0 0
        %1008 = vmatpush.bf16.msra.mxu0 0
        %1009 = vmatpush.bf16.msra.mxu0 0
        %1010 = vmatpush.bf16.msra.mxu0 0
        %1011 = vmatpush.bf16.msra.mxu0 0
        %1012 = vmatpush.bf16.msra.mxu0 %v1003
        %1013 = vmatpush.bf16.msra.mxu0 %v1002
        %1014 = vmatmul.bf16.gmra.mxu0 %v772
        %v1015 = vpop.f32.mrf.mxu0
        %v1016 = vadd.f32 0.0, %v1015
        %v1017 = vpop.f32.mrf.mxu0
        %1018 = vdwg.mxu0
        %v1023 = vunpack.c.l.b16 %v982
        %v1024 = vunpack.c.l.b16 %v983
        %v1025 = vunpack.c.l.b16 %v984
        %v1026 = vunpack.c.l.b16 %v985
        %v1027 = vpack.c.b16 %v1024, %v1023
        %v1028 = vpack.c.b16 %v1026, %v1025
        %1031 = vmatpush.bf16.msra.mxu0 0
        %1032 = vmatpush.bf16.msra.mxu0 0
        %1033 = vmatpush.bf16.msra.mxu0 0
        %1034 = vmatpush.bf16.msra.mxu0 0
        %1035 = vmatpush.bf16.msra.mxu0 0
        %1036 = vmatpush.bf16.msra.mxu0 0
        %1037 = vmatpush.bf16.msra.mxu0 %v1028
        %1038 = vmatpush.bf16.msra.mxu0 %v1027
        %1039 = vmatmul.bf16.gmra.mxu0 %v772
        %v1040 = vpop.f32.mrf.mxu0
        %v1041 = vadd.f32 0.0, %v1040
        %v1042 = vpop.f32.mrf.mxu0
        %1043 = vdwg.mxu0
        %v1048 = vunpack.c.l.b16 %v986
        %v1049 = vunpack.c.l.b16 %v987
        %v1050 = vunpack.c.l.b16 %v988
        %v1051 = vunpack.c.l.b16 %v989
        %v1052 = vpack.c.b16 %v1049, %v1048
        %v1053 = vpack.c.b16 %v1051, %v1050
        %1056 = vmatpush.bf16.msra.mxu0 0
        %1057 = vmatpush.bf16.msra.mxu0 0
        %1058 = vmatpush.bf16.msra.mxu0 0
        %1059 = vmatpush.bf16.msra.mxu0 0
        %1060 = vmatpush.bf16.msra.mxu0 0
        %1061 = vmatpush.bf16.msra.mxu0 0
        %1062 = vmatpush.bf16.msra.mxu0 %v1053
        %1063 = vmatpush.bf16.msra.mxu0 %v1052
        %1064 = vmatmul.bf16.gmra.mxu0 %v772
        %v1065 = vpop.f32.mrf.mxu0
        %v1066 = vadd.f32 0.0, %v1065
        %v1067 = vpop.f32.mrf.mxu0
        %1068 = vdwg.mxu0
        %v1073 = vunpack.c.l.b16 %v990
        %v1074 = vunpack.c.l.b16 %v991
        %v1075 = vunpack.c.l.b16 %v992
        %v1076 = vunpack.c.l.b16 %v993
        %v1077 = vpack.c.b16 %v1074, %v1073
        %v1078 = vpack.c.b16 %v1076, %v1075
        %1081 = vmatpush.bf16.msra.mxu0 0
        %1082 = vmatpush.bf16.msra.mxu0 0
        %1083 = vmatpush.bf16.msra.mxu0 0
        %1084 = vmatpush.bf16.msra.mxu0 0
        %1085 = vmatpush.bf16.msra.mxu0 0
        %1086 = vmatpush.bf16.msra.mxu0 0
        %1087 = vmatpush.bf16.msra.mxu0 %v1078
        %1088 = vmatpush.bf16.msra.mxu0 %v1077
        %1089 = vmatmul.bf16.gmra.mxu0 %v772
        %v1090 = vpop.f32.mrf.mxu0
        %v1091 = vadd.f32 0.0, %v1090
        %v1092 = vpop.f32.mrf.mxu0
        %1093 = vdwg.mxu0
        %v1094 = vpack.c.bf16 %v784, %v784
        %v1095 = vpack.c.bf16 %v809, %v809
        %v1096 = vpack.c.bf16 %v834, %v834
        %v1097 = vpack.c.bf16 %v859, %v859
        %v1098 = vpack.c.bf16 %v900, %v900
        %v1099 = vpack.c.bf16 %v925, %v925
        %v1100 = vpack.c.bf16 %v950, %v950
        %v1101 = vpack.c.bf16 %v975, %v975
        %vm1102 = vcmask 64512
        %v1104 = vsel %vm1102, %v1094, 0
        %v1107 = vsel %vm1102, %v1098, 0
        %1109 = vmatpush.bf16.xpose.msra.mxu0 0
        %1110 = vmatpush.bf16.xpose.msra.mxu0 0
        %1111 = vmatpush.bf16.xpose.msra.mxu0 0
        %1112 = vmatpush.bf16.xpose.msra.mxu0 0
        %1113 = vmatpush.bf16.xpose.msra.mxu0 0
        %1114 = vmatpush.bf16.xpose.msra.mxu0 0
        %1115 = vmatpush.bf16.xpose.msra.mxu0 0
        %1116 = vmatpush.bf16.xpose.msra.mxu0 %v1107
        %1117 = vmatmul.bf16.gmra.mxu0 %v1104
        %v1118 = vpop.f32.mrf.mxu0
        %v1119 = vadd.f32 0.0, %v1118
        %v1120 = vpop.f32.mrf.mxu0
        %1121 = vdwg.mxu0
        %v1123 = vsel %vm1102, %v1095, 0
        %v1126 = vsel %vm1102, %v1099, 0
        %1128 = vmatpush.bf16.xpose.msra.mxu0 0
        %1129 = vmatpush.bf16.xpose.msra.mxu0 0
        %1130 = vmatpush.bf16.xpose.msra.mxu0 0
        %1131 = vmatpush.bf16.xpose.msra.mxu0 0
        %1132 = vmatpush.bf16.xpose.msra.mxu0 0
        %1133 = vmatpush.bf16.xpose.msra.mxu0 0
        %1134 = vmatpush.bf16.xpose.msra.mxu0 0
        %1135 = vmatpush.bf16.xpose.msra.mxu0 %v1126
        %1136 = vmatmul.bf16.gmra.mxu0 %v1123
        %v1137 = vpop.f32.mrf.mxu0
        %v1138 = vadd.f32 0.0, %v1137
        %v1139 = vpop.f32.mrf.mxu0
        %1140 = vdwg.mxu0
        %v1142 = vsel %vm1102, %v1096, 0
        %v1145 = vsel %vm1102, %v1100, 0
        %1147 = vmatpush.bf16.xpose.msra.mxu0 0
        %1148 = vmatpush.bf16.xpose.msra.mxu0 0
        %1149 = vmatpush.bf16.xpose.msra.mxu0 0
        %1150 = vmatpush.bf16.xpose.msra.mxu0 0
        %1151 = vmatpush.bf16.xpose.msra.mxu0 0
        %1152 = vmatpush.bf16.xpose.msra.mxu0 0
        %1153 = vmatpush.bf16.xpose.msra.mxu0 0
        %1154 = vmatpush.bf16.xpose.msra.mxu0 %v1145
        %1155 = vmatmul.bf16.gmra.mxu0 %v1142
        %v1156 = vpop.f32.mrf.mxu0
        %v1157 = vadd.f32 0.0, %v1156
        %v1158 = vpop.f32.mrf.mxu0
        %1159 = vdwg.mxu0
        %v1161 = vsel %vm1102, %v1097, 0
        %v1164 = vsel %vm1102, %v1101, 0
        %1166 = vmatpush.bf16.xpose.msra.mxu0 0
        %1167 = vmatpush.bf16.xpose.msra.mxu0 0
        %1168 = vmatpush.bf16.xpose.msra.mxu0 0
        %1169 = vmatpush.bf16.xpose.msra.mxu0 0
        %1170 = vmatpush.bf16.xpose.msra.mxu0 0
        %1171 = vmatpush.bf16.xpose.msra.mxu0 0
        %1172 = vmatpush.bf16.xpose.msra.mxu0 0
        %1173 = vmatpush.bf16.xpose.msra.mxu0 %v1164
        %1174 = vmatmul.bf16.gmra.mxu0 %v1161
        %v1175 = vpop.f32.mrf.mxu0
        %v1176 = vadd.f32 0.0, %v1175
        %v1177 = vpop.f32.mrf.mxu0
        %1178 = vdwg.mxu0
        %v1179 = vmul.f32 %v1119, 0.35355338
        %v1180 = vmul.f32 %v1138, 0.35355338
        %v1181 = vmul.f32 %v1157, 0.35355338
        %v1182 = vmul.f32 %v1176, 0.35355338
        %v1183 = vsel %vm1102, %v1179, -inf
        %1184 = vmax.xlane.f32.xlu0 %v1183
        %v1185 = vpop.xlane.xlu0 %1184
        %v1186 = vsel %vm1102, %v1180, -inf
        %1187 = vmax.xlane.f32.xlu0 %v1186
        %v1188 = vpop.xlane.xlu0 %1187
        %v1189 = vsel %vm1102, %v1181, -inf
        %1190 = vmax.xlane.f32.xlu0 %v1189
        %v1191 = vpop.xlane.xlu0 %1190
        %v1192 = vsel %vm1102, %v1182, -inf
        %1193 = vmax.xlane.f32.xlu0 %v1192
        %v1194 = vpop.xlane.xlu0 %1193
        %v1195 = vsub.f32 %v1179, %v1185
        %v1196 = vsub.f32 %v1180, %v1188
        %v1197 = vsub.f32 %v1181, %v1191
        %v1198 = vsub.f32 %v1182, %v1194
        %v1199 = vmul.f32 %v1195, 1.442695
        %v1200 = vpow.pop %v1199
        %v1201 = vmul.f32 %v1196, 1.442695
        %v1202 = vpow.pop %v1201
        %v1203 = vmul.f32 %v1197, 1.442695
        %v1204 = vpow.pop %v1203
        %v1205 = vmul.f32 %v1198, 1.442695
        %v1206 = vpow.pop %v1205
        %v1207 = vsel %vm1102, %v1200, 0.0
        %1208 = vadd.xlane.f32.xlu0 %v1207
        %v1209 = vpop.xlane.xlu0 %1208
        %v1210 = vsel %vm1102, %v1202, 0.0
        %1211 = vadd.xlane.f32.xlu0 %v1210
        %v1212 = vpop.xlane.xlu0 %1211
        %v1213 = vsel %vm1102, %v1204, 0.0
        %1214 = vadd.xlane.f32.xlu0 %v1213
        %v1215 = vpop.xlane.xlu0 %1214
        %v1216 = vsel %vm1102, %v1206, 0.0
        %1217 = vadd.xlane.f32.xlu0 %v1216
        %v1218 = vpop.xlane.xlu0 %1217
        %v1219 = vrcp.pop %v1209
        %v1220 = vrcp.pop %v1212
        %v1221 = vrcp.pop %v1215
        %v1222 = vrcp.pop %v1218
        %v1223 = vmul.f32 %v1200, %v1219
        %v1224 = vmul.f32 %v1202, %v1220
        %v1225 = vmul.f32 %v1204, %v1221
        %v1226 = vmul.f32 %v1206, %v1222
        %v1227 = vpack.c.bf16 %v1223, %v1223
        %v1228 = vpack.c.bf16 %v1224, %v1224
        %v1229 = vpack.c.bf16 %v1225, %v1225
        %v1230 = vpack.c.bf16 %v1226, %v1226
        %v1231 = vpack.c.bf16 %v1016, %v1016
        %v1232 = vpack.c.bf16 %v1041, %v1041
        %v1233 = vpack.c.bf16 %v1066, %v1066
        %v1234 = vpack.c.bf16 %v1091, %v1091
        %v1236 = vsel %vm1102, %v1227, 0
        %vm1238 = vcmask 1043456
        %v1240 = vsel %vm1238, %v1231, 0
        %1242 = vmatpush.bf16.msra.mxu0 0
        %1243 = vmatpush.bf16.msra.mxu0 0
        %1244 = vmatpush.bf16.msra.mxu0 0
        %1245 = vmatpush.bf16.msra.mxu0 0
        %1246 = vmatpush.bf16.msra.mxu0 0
        %1247 = vmatpush.bf16.msra.mxu0 0
        %1248 = vmatpush.bf16.msra.mxu0 0
        %1249 = vmatpush.bf16.msra.mxu0 %v1240
        %1250 = vmatmul.bf16.gmra.mxu0 %v1236
        %v1251 = vpop.f32.mrf.mxu0
        %v1252 = vadd.f32 0.0, %v1251
        %v1253 = vpop.f32.mrf.mxu0
        %1254 = vdwg.mxu0
        %v1256 = vsel %vm1102, %v1228, 0
        %v1259 = vsel %vm1238, %v1232, 0
        %1261 = vmatpush.bf16.msra.mxu0 0
        %1262 = vmatpush.bf16.msra.mxu0 0
        %1263 = vmatpush.bf16.msra.mxu0 0
        %1264 = vmatpush.bf16.msra.mxu0 0
        %1265 = vmatpush.bf16.msra.mxu0 0
        %1266 = vmatpush.bf16.msra.mxu0 0
        %1267 = vmatpush.bf16.msra.mxu0 0
        %1268 = vmatpush.bf16.msra.mxu0 %v1259
        %1269 = vmatmul.bf16.gmra.mxu0 %v1256
        %v1270 = vpop.f32.mrf.mxu0
        %v1271 = vadd.f32 0.0, %v1270
        %v1272 = vpop.f32.mrf.mxu0
        %1273 = vdwg.mxu0
        %v1275 = vsel %vm1102, %v1229, 0
        %v1278 = vsel %vm1238, %v1233, 0
        %1280 = vmatpush.bf16.msra.mxu0 0
        %1281 = vmatpush.bf16.msra.mxu0 0
        %1282 = vmatpush.bf16.msra.mxu0 0
        %1283 = vmatpush.bf16.msra.mxu0 0
        %1284 = vmatpush.bf16.msra.mxu0 0
        %1285 = vmatpush.bf16.msra.mxu0 0
        %1286 = vmatpush.bf16.msra.mxu0 0
        %1287 = vmatpush.bf16.msra.mxu0 %v1278
        %1288 = vmatmul.bf16.gmra.mxu0 %v1275
        %v1289 = vpop.f32.mrf.mxu0
        %v1290 = vadd.f32 0.0, %v1289
        %v1291 = vpop.f32.mrf.mxu0
        %1292 = vdwg.mxu0
        %v1294 = vsel %vm1102, %v1230, 0
        %v1297 = vsel %vm1238, %v1234, 0
        %1299 = vmatpush.bf16.msra.mxu0 0
        %1300 = vmatpush.bf16.msra.mxu0 0
        %1301 = vmatpush.bf16.msra.mxu0 0
        %1302 = vmatpush.bf16.msra.mxu0 0
        %1303 = vmatpush.bf16.msra.mxu0 0
        %1304 = vmatpush.bf16.msra.mxu0 0
        %1305 = vmatpush.bf16.msra.mxu0 0
        %1306 = vmatpush.bf16.msra.mxu0 %v1297
        %1307 = vmatmul.bf16.gmra.mxu0 %v1294
        %v1308 = vpop.f32.mrf.mxu0
        %v1309 = vadd.f32 0.0, %v1308
        %v1310 = vpop.f32.mrf.mxu0
        %1311 = vdwg.mxu0
        %v1312 = vpack.c.bf16 %v1252, %v1252
        %v1313 = vpack.c.bf16 %v1271, %v1271
        %v1314 = vpack.c.bf16 %v1290, %v1290
        %v1315 = vpack.c.bf16 %v1309, %v1309
        %v1316 = vld [vmem:[%s667] sm:$0xf]
        %v1317 = vld [vmem:[%s667 + $0x4] sm:$0xf]
        %v1318 = vld [vmem:[%s667 + $0x8] sm:$0xf]
        %v1319 = vld [vmem:[%s667 + $0xc] sm:$0xf]
        %v1321 = vsel %vm1102, %v1312, 0
        %v1324 = vsel %vm1238, %v1316, 0
        %1326 = vmatpush.bf16.msra.mxu0 0
        %1327 = vmatpush.bf16.msra.mxu0 0
        %1328 = vmatpush.bf16.msra.mxu0 0
        %1329 = vmatpush.bf16.msra.mxu0 0
        %1330 = vmatpush.bf16.msra.mxu0 0
        %1331 = vmatpush.bf16.msra.mxu0 0
        %1332 = vmatpush.bf16.msra.mxu0 0
        %1333 = vmatpush.bf16.msra.mxu0 %v1324
        %1334 = vmatmul.bf16.gmra.mxu0 %v1321
        %v1335 = vpop.f32.mrf.mxu0
        %v1336 = vadd.f32 0.0, %v1335
        %v1337 = vpop.f32.mrf.mxu0
        %1338 = vdwg.mxu0
        %v1340 = vsel %vm1102, %v1313, 0
        %v1343 = vsel %vm1238, %v1317, 0
        %1345 = vmatpush.bf16.msra.mxu0 0
        %1346 = vmatpush.bf16.msra.mxu0 0
        %1347 = vmatpush.bf16.msra.mxu0 0
        %1348 = vmatpush.bf16.msra.mxu0 0
        %1349 = vmatpush.bf16.msra.mxu0 0
        %1350 = vmatpush.bf16.msra.mxu0 0
        %1351 = vmatpush.bf16.msra.mxu0 0
        %1352 = vmatpush.bf16.msra.mxu0 %v1343
        %1353 = vmatmul.bf16.gmra.mxu0 %v1340
        %v1354 = vpop.f32.mrf.mxu0
        %v1355 = vadd.f32 0.0, %v1354
        %v1356 = vpop.f32.mrf.mxu0
        %1357 = vdwg.mxu0
        %v1359 = vsel %vm1102, %v1314, 0
        %v1362 = vsel %vm1238, %v1318, 0
        %1364 = vmatpush.bf16.msra.mxu0 0
        %1365 = vmatpush.bf16.msra.mxu0 0
        %1366 = vmatpush.bf16.msra.mxu0 0
        %1367 = vmatpush.bf16.msra.mxu0 0
        %1368 = vmatpush.bf16.msra.mxu0 0
        %1369 = vmatpush.bf16.msra.mxu0 0
        %1370 = vmatpush.bf16.msra.mxu0 0
        %1371 = vmatpush.bf16.msra.mxu0 %v1362
        %1372 = vmatmul.bf16.gmra.mxu0 %v1359
        %v1373 = vpop.f32.mrf.mxu0
        %v1374 = vadd.f32 0.0, %v1373
        %v1375 = vpop.f32.mrf.mxu0
        %1376 = vdwg.mxu0
        %v1378 = vsel %vm1102, %v1315, 0
        %v1381 = vsel %vm1238, %v1319, 0
        %1383 = vmatpush.bf16.msra.mxu0 0
        %1384 = vmatpush.bf16.msra.mxu0 0
        %1385 = vmatpush.bf16.msra.mxu0 0
        %1386 = vmatpush.bf16.msra.mxu0 0
        %1387 = vmatpush.bf16.msra.mxu0 0
        %1388 = vmatpush.bf16.msra.mxu0 0
        %1389 = vmatpush.bf16.msra.mxu0 0
        %1390 = vmatpush.bf16.msra.mxu0 %v1381
        %1391 = vmatmul.bf16.gmra.mxu0 %v1378
        %v1392 = vpop.f32.mrf.mxu0
        %v1393 = vadd.f32 0.0, %v1392
        %v1394 = vpop.f32.mrf.mxu0
        %1395 = vdwg.mxu0
        %v1396 = vsel %vm704, %v1336, 0.0
        %v1397 = vsel %vm704, %v1355, 0.0
        %v1398 = vadd.f32 %v1396, %v1397
        %v1399 = vsel %vm704, %v1374, 0.0
        %v1400 = vadd.f32 %v1398, %v1399
        %v1401 = vsel %vm704, %v1393, 0.0
        %v1402 = vadd.f32 %v1400, %v1401
        %v1403 = vld [vmem:[%s670] sm:$0x1]
        %v1405 = vperm.slane %v1403, 0
        %v1407 = vadd.f32 %v1402, %v1405
        %v1408 = vadd.f32 %v1407, %v701
        %v1409 = vld [vmem:[%s673] sm:$0x1]
        %v1410 = vld [vmem:[%s676] sm:$0x1]
        %v1411 = vsel %vm704, %v1408, 0.0
        %1412 = vadd.xlane.f32.xlu0 %v1411
        %v1413 = vpop.xlane.xlu0 %1412
        %v1414 = vmul.f32 %v1413, %v714
        %v1415 = vsub.f32 %v1408, %v1414
        %v1416 = vmul.f32 %v1415, %v1415
        %v1417 = vsel %vm704, %v1416, 0.0
        %1418 = vadd.xlane.f32.xlu0 %v1417
        %v1419 = vpop.xlane.xlu0 %1418
        %v1420 = vmul.f32 %v1419, %v714
        %v1421 = vadd.f32 %v1420, 1e-05
        %v1422 = vrsqrt.pop %v1421
        %v1423 = vmul.f32 %v1422, %v1421
        %v1424 = vmul.f32 %v1423, %v1422
        %v1425 = vmul.f32 0.5, %v1424
        %v1426 = vsub.f32 1.5, %v1425
        %v1427 = vmul.f32 %v1422, %v1426
        %vm1428 = vweird.f32 %v1421
        %vm1429 = vweird.f32 %v1422
        %vm1430 = vmor %vm1428, %vm1429
        %v1431 = vsel %vm1430, %v1422, %v1427
        %v1432 = vmul.f32 %v1415, %v1431
        %v1434 = vperm.slane %v1409, 0
        %v1436 = vmul.f32 %v1432, %v1434
        %v1438 = vperm.slane %v1410, 0
        %v1440 = vadd.f32 %v1436, %v1438
        %v1441 = vpack.c.bf16 %v1440, %v1440
        %v1442 = vld [vmem:[%s681] sm:$0xf]
        %v1443 = vld [vmem:[%s681 + $0x4] sm:$0xf]
        %v1444 = vld [vmem:[%s681 + $0x8] sm:$0xf]
        %v1445 = vld [vmem:[%s681 + $0xc] sm:$0xf]
        %v1446 = vld [vmem:[%s684] sm:$0x1]
        %v1448 = vperm.slane %v1446, 0
        %v1454 = vunpack.c.l.b16 %v1442
        %v1455 = vunpack.c.l.b16 %v1443
        %v1456 = vunpack.c.l.b16 %v1444
        %v1457 = vunpack.c.l.b16 %v1445
        %v1458 = vpack.c.b16 %v1455, %v1454
        %v1459 = vpack.c.b16 %v1457, %v1456
        %v1463 = vsel %vm704, %v1441, 0
        %1465 = vmatpush.bf16.msra.mxu0 0
        %1466 = vmatpush.bf16.msra.mxu0 0
        %1467 = vmatpush.bf16.msra.mxu0 0
        %1468 = vmatpush.bf16.msra.mxu0 0
        %1469 = vmatpush.bf16.msra.mxu0 0
        %1470 = vmatpush.bf16.msra.mxu0 0
        %1471 = vmatpush.bf16.msra.mxu0 %v1459
        %1472 = vmatpush.bf16.msra.mxu0 %v1458
        %1473 = vmatmul.bf16.gmra.mxu0 %v1463
        %v1474 = vpop.f32.mrf.mxu0
        %v1475 = vadd.f32 %v1448, %v1474
        %v1476 = vpop.f32.mrf.mxu0
        %1477 = vdwg.mxu0
        %v1478 = vmul.f32 %v1475, 0.5
        %v1479 = vmul.f32 %v1475, 0.70710677
        %v1480 = vmul.f32 %v1479, %v1479
        %v1481 = vmin.f32 16.0, %v1480
        %v1482 = vmul.f32 %v1481, 2.1237322e-06
        %v1483 = vadd.f32 %v1482, 0.00028619796
        %v1484 = vmul.f32 %v1481, %v1483
        %v1485 = vadd.f32 %v1484, 0.0036580483
        %v1486 = vmul.f32 %v1481, %v1485
        %v1487 = vadd.f32 %v1486, 0.05243302
        %v1488 = vmul.f32 %v1481, %v1487
        %v1489 = vadd.f32 %v1488, 0.18741608
        %v1490 = vmul.f32 %v1481, %v1489
        %v1491 = vadd.f32 %v1490, 1.1283791
        %v1492 = vmul.f32 %v1479, %v1491
        %v1493 = vmul.f32 %v1481, 3.8918573e-05
        %v1494 = vadd.f32 %v1493, 0.001143296
        %v1495 = vmul.f32 %v1481, %v1494
        %v1496 = vadd.f32 %v1495, 0.014752088
        %v1497 = vmul.f32 %v1481, %v1496
        %v1498 = vadd.f32 %v1497, 0.112945676
        %v1499 = vmul.f32 %v1481, %v1498
        %v1500 = vadd.f32 %v1499, 0.4994258
        %v1501 = vmul.f32 %v1481, %v1500
        %v1502 = vadd.f32 %v1501, 1.0
        %v1503 = vrcp.pop %v1502
        %v1504 = vmul.f32 %v1502, %v1503
        %v1505 = vsub.f32 1.0, %v1504
        %v1506 = vmul.f32 %v1503, %v1505
        %v1507 = vadd.f32 %v1503, %v1506
        %vm1508 = vweird.f32 %v1502
        %vm1509 = vweird.f32 %v1503
        %vm1510 = vmor %vm1508, %vm1509
        %v1511 = vsel %vm1510, %v1503, %v1507
        %v1512 = vand.u32 2147483647, %v1502
        %vm1513 = vcmp.eq.f32.partialorder %v1512, 8.507059e+37
        %v1514 = vand.u32 %v1502, 2147483648
        %v1515 = vor.u32 1.1754944e-38, %v1514
        %v1516 = vsel %vm1513, %v1515, %v1511
        %v1517 = vmul.f32 %v1492, %v1516
        %v1518 = vmin.f32 %v1517, 1.0
        %v1519 = vmax.f32 %v1518, -1.0
        %v1520 = vadd.f32 %v1519, 1.0
        %v1521 = vmul.f32 %v1478, %v1520
        %v1522 = vpack.c.bf16 %v1521, %v1521
        %v1523 = vld [vmem:[%s689] sm:$0xf]
        %v1524 = vld [vmem:[%s689 + $0x4] sm:$0xf]
        %v1525 = vld [vmem:[%s689 + $0x8] sm:$0xf]
        %v1526 = vld [vmem:[%s689 + $0xc] sm:$0xf]
        %v1527 = vld [vmem:[%s689 + $0x10] sm:$0xf]
        %v1528 = vld [vmem:[%s689 + $0x14] sm:$0xf]
        %v1529 = vld [vmem:[%s689 + $0x18] sm:$0xf]
        %v1530 = vld [vmem:[%s689 + $0x1c] sm:$0xf]
        %v1531 = vld [vmem:[%s692] sm:$0x1]
        %v1533 = vperm.slane %v1531, 0
        %v1543 = vunpack.c.l.b16 %v1523
        %v1544 = vunpack.c.l.b16 %v1524
        %v1545 = vunpack.c.l.b16 %v1525
        %v1546 = vunpack.c.l.b16 %v1526
        %v1547 = vunpack.c.l.b16 %v1527
        %v1548 = vunpack.c.l.b16 %v1528
        %v1549 = vunpack.c.l.b16 %v1529
        %v1550 = vunpack.c.l.b16 %v1530
        %v1551 = vpack.c.b16 %v1544, %v1543
        %v1552 = vpack.c.b16 %v1546, %v1545
        %v1553 = vpack.c.b16 %v1548, %v1547
        %v1554 = vpack.c.b16 %v1550, %v1549
        %vm1559 = vcmask 523264
        %v1561 = vsel %vm1559, %v1522, 0
        %1563 = vmatpush.bf16.msra.mxu0 0
        %1564 = vmatpush.bf16.msra.mxu0 0
        %1565 = vmatpush.bf16.msra.mxu0 0
        %1566 = vmatpush.bf16.msra.mxu0 0
        %1567 = vmatpush.bf16.msra.mxu0 %v1554
        %1568 = vmatpush.bf16.msra.mxu0 %v1553
        %1569 = vmatpush.bf16.msra.mxu0 %v1552
        %1570 = vmatpush.bf16.msra.mxu0 %v1551
        %1571 = vmatmul.bf16.gmra.mxu0 %v1561
        %v1572 = vpop.f32.mrf.mxu0
        %v1573 = vadd.f32 %v1533, %v1572
        %v1574 = vpop.f32.mrf.mxu0
        %1575 = vdwg.mxu0
        %v1576 = vadd.f32 %v1573, %v1408
        %1577 = vst.msk [vmem:[#allocation2] sm:$0xff] %vm704, %v1576
        %1578 = vst.msk [vmem:[%s637] sm:$0xff] %vm704, %v1576
        %s1579 = sand.u32 %s412, 1
        %s1580 = scalar_lea.sflag [#allocation4], %s1579
        %s1581 = sand.u32 %s412, 1
        %s1582 = smul.addr %s1581, 8
        %s1583 = scalar_lea.vmem [#allocation3], %s1582
        // Predicated region
        $region81: #{tpu_custom_call.1} parent=75 // pred_check
          %p1584 = pneg %p422
        $region82: #{tpu_custom_call.1} parent=75 // pred_check_branch
          %1586 = sbr.rel (%p1584) target = $region84
        $region83: #{tpu_custom_call.1} parent=75 // pred_region
          %1588 = vsyncadd %s1580, 0
          %s1589 = smul.addr %s32, 8
          %s1590 = scalar_lea.hbm %s14, %s1589
          %s1592 = sshll.u32 %s1583, 4
          %s1593 = int_to_ptr.vmem [resolvable:$true] %s1592
          %s1594 = sshll.u32 %s1590, 4
          %s1595 = int_to_ptr.hbm [resolvable:$true] %s1594
          %1597 = dma.vmem_to_hbm [thread:$0]  %s1593, 128, %s1595, %s1580
        $region84: #{tpu_custom_call.1} parent=75 // pred_fallthru
          _
      $region76: #{tpu_custom_call.1} parent=5 // pred_fallthru
        _
      %p1598 = scmp.le.s32.totalorder 2, %s23
      // Predicated region
      $region85: #{tpu_custom_call.1} parent=5 // pred_check
        %p1599 = pneg %p1598
      $region86: #{tpu_custom_call.1} parent=5 // pred_check_branch
        %1601 = sbr.rel (%p1599) target = $region88
      $region87: #{tpu_custom_call.1} parent=5 // pred_region
        %s1602 = ssub.s32 %s23, 2
        // Predicated region
        $region89: #{tpu_custom_call.1} parent=87 // pred_check
          %p1603 = pneg %p428
        $region90: #{tpu_custom_call.1} parent=87 // pred_check_branch
          %1605 = sbr.rel (%p1603) target = $region92
        $region91: #{tpu_custom_call.1} parent=87 // pred_region
          %s1606 = sand.u32 %s413, 1
          %s1607 = scalar_lea.sflag [#allocation4], %s1606
          %s1608 = sand.u32 %s413, 1
          %s1609 = smul.addr %s1608, 8
          %s1610 = scalar_lea.vmem [#allocation3], %s1609
          %1612 = dma.done %s1607, 128
        $region92: #{tpu_custom_call.1} parent=87 // pred_fallthru
          _
      $region88: #{tpu_custom_call.1} parent=5 // pred_fallthru
        _
    $region6: #{tpu_custom_call.1} parent=1 // loop_footer
      %s27 = sadd.s32 1, %s23
    $region7: #{tpu_custom_call.1} parent=1 // loop_footer_branch
      %22 = sbr.rel target = $region3
    $region8: #{tpu_custom_call.1} parent=1 // loop_exit
      _
    %1613 = vsyncpa [#allocation4], 1
    %s1614 = scalar_lea.sflag [#allocation4], 1
    %1615 = vsyncpa %s1614, 1

</llo_original>
